<compile_context>
chip_gen: v5e
topology: v5e:2x2
jax: 0.10.0
libtpu: 0.0.40
codegen_flags: <defaults>
</compile_context>

<pallas_src>
import functools

import jax
import jax.numpy as jnp
import numpy as np
from jax.experimental import pallas as pl
from jax.experimental.pallas import tpu as pltpu

_EPS = 1e-5


def _channel_fold_mats(W, C):
    """0/1 matrices for per-channel stats in the lane-dense layout.

    F: (W*C, C)  with F[w*C + c, c'] = (c == c')   ->  s_c   = s_dense @ F
    G: (C, W*C)  with G[c', w*C + c] = (c == c')   ->  dense = per_chan @ G
    Built from 2-D iotas; consumed by tiny MXU dots (no cross-lane relayouts).
    """
    r = jax.lax.broadcasted_iota(jnp.int32, (W * C, C), 0) % C
    c = jax.lax.broadcasted_iota(jnp.int32, (W * C, C), 1)
    F = (r == c).astype(jnp.float32)
    r2 = jax.lax.broadcasted_iota(jnp.int32, (C, W * C), 0)
    c2 = jax.lax.broadcasted_iota(jnp.int32, (C, W * C), 1) % C
    G = (r2 == c2).astype(jnp.float32)
    return F, G


def _double_conv_kernel(x_ref, w1_ref, b1_ref, w2_ref, b2_ref, o_ref,
                        xpad_ref, midpad_ref, *, H, W, Cin, Cmid, Cout):
    """One batch element: (conv3x3 -> InstanceNorm -> ReLU) x 2, fully fused.

    Lane-dense layout: a pixel row is one sublane, (width*channels) on lanes.
      x_ref:      (1, H, W*Cin)                 input slab
      w1_ref:     (3, (W+2)*Cin,  W*Cmid)       banded conv1 weights (per ky tap)
      b1_ref:     (1, W*Cmid)                   conv1 bias, lane-dense
      w2_ref:     (3, (W+2)*Cmid, W*Cout)       banded conv2 weights (per ky tap)
      b2_ref:     (1, W*Cout)                   conv2 bias, lane-dense
      o_ref:      (1, H, W*Cout)                lane-dense output slab
      xpad_ref:   VMEM (H+2, (W+2)*Cin)         halo-padded input scratch
      midpad_ref: VMEM (H+2, (W+2)*Cmid)        halo-padded mid activation
                                                (never written to HBM)
    """
    dt = xpad_ref.dtype

    def zero_halo_rim(ref, C):
        # Zero only the 1-pixel rim; the interior is fully overwritten each step.
        width = (W + 2) * C
        zrow = jnp.zeros((1, width), dt)
        ref[0:1, :] = zrow
        ref[H + 1:H + 2, :] = zrow
        zcol = jnp.zeros((H, C), dt)
        ref[1:H + 1, 0:C] = zcol
        ref[1:H + 1, (W + 1) * C:width] = zcol

    def conv_in_relu(slab_ref, wb_ref, bias_ref, C_out):
        # 3x3 conv as 3 row-shifted matmuls against banded weights:
        # M=H, K=(W+2)*C_in, N=W*C_out  (one MXU dot per vertical tap ky).
        acc = jnp.zeros((H, W * C_out), jnp.float32)
        for ky in range(3):
            acc = acc + jnp.dot(slab_ref[ky:ky + H, :], wb_ref[ky],
                                preferred_element_type=jnp.float32)
        acc = acc + bias_ref[...].astype(jnp.float32)

        # InstanceNorm2d (affine=False, biased variance, eps=1e-5).  Stats are
        # fused as E[x] / E[x^2] in fp32 (single pass over the accumulator);
        # per-channel fold / broadcast-back go through tiny 0/1 matmuls so the
        # lane-dense layout never needs a reshape/relayout.
        F, G = _channel_fold_mats(W, C_out)
        inv_hw = 1.0 / float(H * W)
        s = jnp.sum(acc, axis=0, keepdims=True)                  # (1, W*C_out)
        ss = jnp.sum(acc * acc, axis=0, keepdims=True)           # (1, W*C_out)
        mean_c = jnp.dot(s, F, preferred_element_type=jnp.float32) * inv_hw
        ex2_c = jnp.dot(ss, F, preferred_element_type=jnp.float32) * inv_hw
        var_c = ex2_c - mean_c * mean_c
        scale_c = jax.lax.rsqrt(var_c + _EPS)                    # EUP rsqrt
        mean_d = jnp.dot(mean_c, G, preferred_element_type=jnp.float32)
        scale_d = jnp.dot(scale_c, G, preferred_element_type=jnp.float32)
        return jnp.maximum((acc - mean_d) * scale_d, 0.0)        # ReLU, fp32

    # Stage 1: halo-pad the input (rim-only memset) and run conv1 + IN + ReLU.
    zero_halo_rim(xpad_ref, Cin)
    xpad_ref[1:H + 1, Cin:(W + 1) * Cin] = x_ref[0].astype(dt)
    y1 = conv_in_relu(xpad_ref, w1_ref, b1_ref, Cmid)

    # Stage 2: intermediate activation stays in VMEM; re-pad halo and run conv2.
    zero_halo_rim(midpad_ref, Cmid)
    midpad_ref[1:H + 1, Cmid:(W + 1) * Cmid] = y1.astype(dt)
    y2 = conv_in_relu(midpad_ref, w2_ref, b2_ref, Cout)

    # Lane-dense store (last dim W*Cout = 128 at demo shapes): unmasked vst,
    # no output interleave/reshape.
    o_ref[0] = y2.astype(o_ref.dtype)


def _band_weights(w_hwio, W):
    """(3, 3, Cin, Cout) HWIO -> (3, (W+2)*Cin, W*Cout) banded matrices.

    B[ky, (w+kx)*Cin + ci, w*Cout + co] = w_hwio[ky, kx, ci, co], so the conv
    at vertical tap ky becomes one lane-dense matmul: slab[ky:ky+H, :] @ B[ky].
    One-time wrapper-side prep (tiny at these sizes).
    """
    _, _, Cin, Cout = w_hwio.shape
    eye_w = jnp.eye(W, dtype=w_hwio.dtype)
    B = jnp.zeros((3, (W + 2) * Cin, W * Cout), w_hwio.dtype)
    for ky in range(3):
        for kx in range(3):
            blk = jnp.kron(eye_w, w_hwio[ky, kx])        # (W*Cin, W*Cout)
            B = B.at[ky, kx * Cin:kx * Cin + W * Cin, :].add(blk)
    return B


def _double_conv_nhwc(x_nhwc, w1, b1, w2, b2, *, mxu_dtype=None):
    N, H, W, Cin = x_nhwc.shape
    Cmid = w1.shape[-1]
    Cout = w2.shape[-1]
    K1, N1 = (W + 2) * Cin, W * Cmid
    K2, N2 = (W + 2) * Cmid, W * Cout

    # Lane-dense views / parameters (metadata reshape + one-time weight prep).
    x2d = x_nhwc.reshape(N, H, W * Cin)
    w1b = _band_weights(w1, W)
    w2b = _band_weights(w2, W)
    b1d = jnp.tile(b1.reshape(1, Cmid), (1, W))          # (1, W*Cmid)
    b2d = jnp.tile(b2.reshape(1, Cout), (1, W))          # (1, W*Cout)

    scratch_dtype = jnp.float32 if mxu_dtype is None else mxu_dtype
    if mxu_dtype is not None:
        # Cast MXU operands ONCE here, not per tap inside the kernel.
        w1b = w1b.astype(mxu_dtype)
        w2b = w2b.astype(mxu_dtype)

    kernel = functools.partial(_double_conv_kernel,
                               H=H, W=W, Cin=Cin, Cmid=Cmid, Cout=Cout)

    def _nbytes(a):
        return a.size * jnp.dtype(a.dtype).itemsize

    out_bytes = N * H * W * Cout * jnp.dtype(x_nhwc.dtype).itemsize
    cost = pl.CostEstimate(
        flops=int(2 * N * 3 * H * (K1 * N1 + K2 * N2)),
        transcendentals=int(N * (Cmid + Cout)),
        bytes_accessed=int(_nbytes(x2d) + _nbytes(w1b) + _nbytes(w2b)
                           + _nbytes(b1d) + _nbytes(b2d) + out_bytes),
    )

    # TODO(synk): at real UNet sizes add an H-tile grid axis (two-pass
    # InstanceNorm with a cross-tile stats accumulator), set vmem_limit_bytes
    # for v7x's 64 MiB VMEM, single-buffer the grid-invariant weight inputs
    # (pipeline_mode=pl.Buffered(1)), and pick generation-specific matmul tile
    # sizes (N-tile 128 on v5e, 256 on v6e/v7x).  For channel counts >= 128,
    # switch to a channels-on-lanes im2col (K = 9*C) instead of the banded
    # small-channel formulation used here.
    out = pl.pallas_call(
        kernel,
        out_shape=jax.ShapeDtypeStruct((N, H, W * Cout), x_nhwc.dtype),
        grid_spec=pltpu.PrefetchScalarGridSpec(
            num_scalar_prefetch=0,
            grid=(N,),
            in_specs=[
                pl.BlockSpec((1, H, W * Cin), lambda n: (n, 0, 0)),
                pl.BlockSpec((3, K1, N1), lambda n: (0, 0, 0)),
                pl.BlockSpec((1, N1), lambda n: (0, 0)),
                pl.BlockSpec((3, K2, N2), lambda n: (0, 0, 0)),
                pl.BlockSpec((1, N2), lambda n: (0, 0)),
            ],
            out_specs=pl.BlockSpec((1, H, W * Cout), lambda n: (n, 0, 0)),
            scratch_shapes=[
                pltpu.VMEM((H + 2, (W + 2) * Cin), scratch_dtype),
                pltpu.VMEM((H + 2, (W + 2) * Cmid), scratch_dtype),
            ],
        ),
        compiler_params=pltpu.CompilerParams(
            dimension_semantics=("parallel",),
        ),
        cost_estimate=cost,
    )(x2d, w1b, b1d, w2b, b2d)

    return out.reshape(N, H, W, Cout)


@functools.partial(jax.jit, static_argnames=("use_bf16_mxu",))
def double_conv(x_nchw, w1, b1, w2, b2, use_bf16_mxu=False):
    """DoubleConv forward.  NCHW in / NCHW out to match the PyTorch module.

    use_bf16_mxu=True uses bf16 MXU operands and bf16 scratch slabs (fp32
    accumulation / InstanceNorm math); off in the demo for exact fp32 parity.
    """
    mxu_dtype = jnp.bfloat16 if use_bf16_mxu else None
    # TODO(synk): in a full UNet keep activations NHWC (lane-dense) end-to-end
    # so these two boundary transposes (a full HBM pass each at real sizes)
    # disappear.
    x = jnp.transpose(x_nchw, (0, 2, 3, 1))   # NCHW -> NHWC
    y = _double_conv_nhwc(x, w1, b1, w2, b2, mxu_dtype=mxu_dtype)
    return jnp.transpose(y, (0, 3, 1, 2))     # NHWC -> NCHW


def _reference(x_nchw, w1, b1, w2, b2):
    """Pure-JAX reference (lax conv + instance norm + relu) for verification."""
    def block(x, w, b):
        y = jax.lax.conv_general_dilated(
            x, w, window_strides=(1, 1), padding=((1, 1), (1, 1)),
            dimension_numbers=("NCHW", "HWIO", "NCHW"))
        y = y + b[None, :, None, None]
        mean = jnp.mean(y, axis=(2, 3), keepdims=True)
        var = jnp.mean((y - mean) ** 2, axis=(2, 3), keepdims=True)
        y = (y - mean) * jax.lax.rsqrt(var + _EPS)
        return jnp.maximum(y, 0.0)

    x = block(x_nchw, w1, b1)
    x = block(x, w2, b2)
    return x


if __name__ == "__main__":
    # DoubleConv(in_channels=4, out_channels=8) -> mid_channels = 8
    N, Cin, H, W = 2, 4, 16, 16
    Cmid = Cout = 8

    key = jax.random.PRNGKey(0)
    kx, kw1, kb1, kw2, kb2 = jax.random.split(key, 5)

    x = jax.random.normal(kx, (N, Cin, H, W), dtype=jnp.float32)

    # Deterministic synthetic parameters (HWIO layout for weights).
    fan1 = Cin * 9
    w1 = jax.random.uniform(kw1, (3, 3, Cin, Cmid), jnp.float32,
                            minval=-1.0, maxval=1.0) / np.sqrt(fan1)
    b1 = jax.random.uniform(kb1, (Cmid,), jnp.float32,
                            minval=-1.0, maxval=1.0) / np.sqrt(fan1)
    fan2 = Cmid * 9
    w2 = jax.random.uniform(kw2, (3, 3, Cmid, Cout), jnp.float32,
                            minval=-1.0, maxval=1.0) / np.sqrt(fan2)
    b2 = jax.random.uniform(kb2, (Cout,), jnp.float32,
                            minval=-1.0, maxval=1.0) / np.sqrt(fan2)

    out = double_conv(x, w1, b1, w2, b2)
    out = jax.block_until_ready(out)

    ref = jax.block_until_ready(_reference(x, w1, b1, w2, b2))
    np.testing.assert_allclose(np.asarray(out), np.asarray(ref),
                               rtol=1e-4, atol=1e-4)

    assert out.shape == (N, Cout, H, W)
    print("KERNEL_OK")
</pallas_src>

<mosaic_0001>
module attributes {stable_mosaic.version = 11 : i64} {
  func.func @_double_conv_kernel(%arg0: i32, %arg1: memref<1x16x64xf32, #tpu.memory_space<vmem>>, %arg2: memref<3x72x128xf32, #tpu.memory_space<vmem>>, %arg3: memref<1x128xf32, #tpu.memory_space<vmem>>, %arg4: memref<3x144x128xf32, #tpu.memory_space<vmem>>, %arg5: memref<1x128xf32, #tpu.memory_space<vmem>>, %arg6: memref<1x16x128xf32, #tpu.memory_space<vmem>>, %arg7: memref<18x72xf32, #tpu.memory_space<vmem>>, %arg8: memref<18x144xf32, #tpu.memory_space<vmem>>) attributes {dimension_semantics = [#tpu.dimension_semantics<parallel>], iteration_bounds = array<i64: 2>, scalar_prefetch = 0 : i64, scratch_operands = 2 : i64, tpu.core_type = #tpu.core_type<tc>, window_params = [{transform_indices = @transform_0, window_bounds = array<i64: 1, 16, 64>}, {pipeline_mode = #tpu.pipeline_mode<synchronous>, transform_indices = @transform_1, window_bounds = array<i64: 3, 72, 128>}, {pipeline_mode = #tpu.pipeline_mode<synchronous>, transform_indices = @transform_2, window_bounds = array<i64: 1, 128>}, {pipeline_mode = #tpu.pipeline_mode<synchronous>, transform_indices = @transform_3, window_bounds = array<i64: 3, 144, 128>}, {pipeline_mode = #tpu.pipeline_mode<synchronous>, transform_indices = @transform_4, window_bounds = array<i64: 1, 128>}, {transform_indices = @transform_5, window_bounds = array<i64: 1, 16, 128>}]} {
    %cst = arith.constant 0.000000e+00 : f32
    %0 = vector.broadcast %cst : f32 to vector<1x72xf32>
    %c0 = arith.constant 0 : index
    %c0_0 = arith.constant 0 : index
    %1 = vector.load %arg7[%c0, %c0_0] : memref<18x72xf32, #tpu.memory_space<vmem>>, vector<1x72xf32>
    tpu.vector_store %arg7[%c0, %c0_0], %0 {strides = array<i32>} : memref<18x72xf32, #tpu.memory_space<vmem>>, vector<1x72xf32>,
    %c17 = arith.constant 17 : index
    %c0_1 = arith.constant 0 : index
    %2 = vector.load %arg7[%c17, %c0_1] : memref<18x72xf32, #tpu.memory_space<vmem>>, vector<1x72xf32>
    tpu.vector_store %arg7[%c17, %c0_1], %0 {strides = array<i32>} : memref<18x72xf32, #tpu.memory_space<vmem>>, vector<1x72xf32>,
    %cst_2 = arith.constant 0.000000e+00 : f32
    %3 = vector.broadcast %cst_2 : f32 to vector<16x4xf32>
    %c1 = arith.constant 1 : index
    %c0_3 = arith.constant 0 : index
    %4 = vector.load %arg7[%c1, %c0_3] : memref<18x72xf32, #tpu.memory_space<vmem>>, vector<16x4xf32>
    tpu.vector_store %arg7[%c1, %c0_3], %3 {strides = array<i32>} : memref<18x72xf32, #tpu.memory_space<vmem>>, vector<16x4xf32>,
    %c1_4 = arith.constant 1 : index
    %c68 = arith.constant 68 : index
    %5 = vector.load %arg7[%c1_4, %c68] : memref<18x72xf32, #tpu.memory_space<vmem>>, vector<16x4xf32>
    tpu.vector_store %arg7[%c1_4, %c68], %3 {strides = array<i32>} : memref<18x72xf32, #tpu.memory_space<vmem>>, vector<16x4xf32>,
    %c0_5 = arith.constant 0 : index
    %c0_6 = arith.constant 0 : index
    %c0_7 = arith.constant 0 : index
    %6 = vector.load %arg1[%c0_5, %c0_6, %c0_7] : memref<1x16x64xf32, #tpu.memory_space<vmem>>, vector<1x16x64xf32>
    %7 = vector.shape_cast %6 : vector<1x16x64xf32> to vector<16x64xf32>
    %c1_8 = arith.constant 1 : index
    %c4 = arith.constant 4 : index
    %8 = vector.load %arg7[%c1_8, %c4] : memref<18x72xf32, #tpu.memory_space<vmem>>, vector<16x64xf32>
    tpu.vector_store %arg7[%c1_8, %c4], %7 {strides = array<i32>} : memref<18x72xf32, #tpu.memory_space<vmem>>, vector<16x64xf32>,
    %cst_9 = arith.constant 0.000000e+00 : f32
    %9 = vector.broadcast %cst_9 : f32 to vector<16x128xf32>
    %c0_10 = arith.constant 0 : index
    %c0_11 = arith.constant 0 : index
    %10 = vector.load %arg7[%c0_10, %c0_11] : memref<18x72xf32, #tpu.memory_space<vmem>>, vector<16x72xf32>
    %c0_12 = arith.constant 0 : index
    %c0_13 = arith.constant 0 : index
    %c0_14 = arith.constant 0 : index
    %11 = vector.load %arg2[%c0_12, %c0_13, %c0_14] : memref<3x72x128xf32, #tpu.memory_space<vmem>>, vector<1x72x128xf32>
    %12 = vector.shape_cast %11 : vector<1x72x128xf32> to vector<72x128xf32>
    %cst_15 = arith.constant dense<0.000000e+00> : vector<16x128xf32>
    %13 = tpu.matmul %10, %12, %cst_15 {dimension_numbers = #tpu.dot_dimension_numbers<[1], [0], [0], [1], [0, 0, 1, 1], [], []>} : vector<16x72xf32>, vector<72x128xf32>, vector<16x128xf32> -> vector<16x128xf32>
    %14 = arith.addf %9, %13 : vector<16x128xf32>
    %c1_16 = arith.constant 1 : index
    %c0_17 = arith.constant 0 : index
    %15 = vector.load %arg7[%c1_16, %c0_17] : memref<18x72xf32, #tpu.memory_space<vmem>>, vector<16x72xf32>
    %c1_18 = arith.constant 1 : index
    %c0_19 = arith.constant 0 : index
    %c0_20 = arith.constant 0 : index
    %16 = vector.load %arg2[%c1_18, %c0_19, %c0_20] : memref<3x72x128xf32, #tpu.memory_space<vmem>>, vector<1x72x128xf32>
    %17 = vector.shape_cast %16 : vector<1x72x128xf32> to vector<72x128xf32>
    %cst_21 = arith.constant dense<0.000000e+00> : vector<16x128xf32>
    %18 = tpu.matmul %15, %17, %cst_21 {dimension_numbers = #tpu.dot_dimension_numbers<[1], [0], [0], [1], [0, 0, 1, 1], [], []>} : vector<16x72xf32>, vector<72x128xf32>, vector<16x128xf32> -> vector<16x128xf32>
    %19 = arith.addf %14, %18 : vector<16x128xf32>
    %c2 = arith.constant 2 : index
    %c0_22 = arith.constant 0 : index
    %20 = vector.load %arg7[%c2, %c0_22] : memref<18x72xf32, #tpu.memory_space<vmem>>, vector<16x72xf32>
    %c2_23 = arith.constant 2 : index
    %c0_24 = arith.constant 0 : index
    %c0_25 = arith.constant 0 : index
    %21 = vector.load %arg2[%c2_23, %c0_24, %c0_25] : memref<3x72x128xf32, #tpu.memory_space<vmem>>, vector<1x72x128xf32>
    %22 = vector.shape_cast %21 : vector<1x72x128xf32> to vector<72x128xf32>
    %cst_26 = arith.constant dense<0.000000e+00> : vector<16x128xf32>
    %23 = tpu.matmul %20, %22, %cst_26 {dimension_numbers = #tpu.dot_dimension_numbers<[1], [0], [0], [1], [0, 0, 1, 1], [], []>} : vector<16x72xf32>, vector<72x128xf32>, vector<16x128xf32> -> vector<16x128xf32>
    %24 = arith.addf %19, %23 : vector<16x128xf32>
    %c0_27 = arith.constant 0 : index
    %c0_28 = arith.constant 0 : index
    %25 = vector.load %arg3[%c0_27, %c0_28] : memref<1x128xf32, #tpu.memory_space<vmem>>, vector<1x128xf32>
    %26 = vector.broadcast %25 : vector<1x128xf32> to vector<16x128xf32>
    %27 = arith.addf %24, %26 : vector<16x128xf32>
    %28 = tpu.iota {dimensions = array<i32: 0>} : vector<128x8xi32>
    %c8_i32 = arith.constant 8 : i32
    %c0_i32 = arith.constant 0 : i32
    %29 = arith.cmpi eq, %c8_i32, %c0_i32 : i32
    %c1_i32 = arith.constant 1 : i32
    %30 = arith.select %29, %c1_i32, %c8_i32 : i32
    %31 = vector.broadcast %30 : i32 to vector<128x8xi32>
    %32 = arith.remsi %28, %31 : vector<128x8xi32>
    %c0_i32_29 = arith.constant 0 : i32
    %33 = vector.broadcast %c0_i32_29 : i32 to vector<128x8xi32>
    %34 = arith.cmpi ne, %32, %33 : vector<128x8xi32>
    %c0_i32_30 = arith.constant 0 : i32
    %35 = vector.broadcast %c0_i32_30 : i32 to vector<128x8xi32>
    %36 = arith.cmpi slt, %32, %35 : vector<128x8xi32>
    %c0_i32_31 = arith.constant 0 : i32
    %37 = arith.cmpi slt, %30, %c0_i32_31 : i32
    %38 = vector.broadcast %37 : i1 to vector<128x8xi1>
    %39 = vector.broadcast %38 : vector<128x8xi1> to vector<128x8xi1>
    %40 = arith.xori %36, %39 : vector<128x8xi1>
    %41 = arith.andi %40, %34 : vector<128x8xi1>
    %42 = vector.broadcast %30 : i32 to vector<128x8xi32>
    %43 = arith.addi %32, %42 : vector<128x8xi32>
    %44 = arith.select %41, %43, %32 : vector<128x8xi1>, vector<128x8xi32>
    %45 = tpu.iota {dimensions = array<i32: 1>} : vector<128x8xi32>
    %46 = arith.cmpi eq, %44, %45 : vector<128x8xi32>
    %47 = arith.extui %46 : vector<128x8xi1> to vector<128x8xi32>
    %48 = arith.sitofp %47 : vector<128x8xi32> to vector<128x8xf32>
    %49 = tpu.iota {dimensions = array<i32: 0>} : vector<8x128xi32>
    %50 = tpu.iota {dimensions = array<i32: 1>} : vector<8x128xi32>
    %c8_i32_32 = arith.constant 8 : i32
    %c0_i32_33 = arith.constant 0 : i32
    %51 = arith.cmpi eq, %c8_i32_32, %c0_i32_33 : i32
    %c1_i32_34 = arith.constant 1 : i32
    %52 = arith.select %51, %c1_i32_34, %c8_i32_32 : i32
    %53 = vector.broadcast %52 : i32 to vector<8x128xi32>
    %54 = arith.remsi %50, %53 : vector<8x128xi32>
    %c0_i32_35 = arith.constant 0 : i32
    %55 = vector.broadcast %c0_i32_35 : i32 to vector<8x128xi32>
    %56 = arith.cmpi ne, %54, %55 : vector<8x128xi32>
    %c0_i32_36 = arith.constant 0 : i32
    %57 = vector.broadcast %c0_i32_36 : i32 to vector<8x128xi32>
    %58 = arith.cmpi slt, %54, %57 : vector<8x128xi32>
    %c0_i32_37 = arith.constant 0 : i32
    %59 = arith.cmpi slt, %52, %c0_i32_37 : i32
    %60 = vector.broadcast %59 : i1 to vector<8x128xi1>
    %61 = vector.broadcast %60 : vector<8x128xi1> to vector<8x128xi1>
    %62 = arith.xori %58, %61 : vector<8x128xi1>
    %63 = arith.andi %62, %56 : vector<8x128xi1>
    %64 = vector.broadcast %52 : i32 to vector<8x128xi32>
    %65 = arith.addi %54, %64 : vector<8x128xi32>
    %66 = arith.select %63, %65, %54 : vector<8x128xi1>, vector<8x128xi32>
    %67 = arith.cmpi eq, %49, %66 : vector<8x128xi32>
    %68 = arith.extui %67 : vector<8x128xi1> to vector<8x128xi32>
    %69 = arith.sitofp %68 : vector<8x128xi32> to vector<8x128xf32>
    %cst_38 = arith.constant dense<0.000000e+00> : vector<128xf32>
    %70 = vector.multi_reduction <add>, %27, %cst_38 [0] : vector<16x128xf32> to vector<128xf32>
    %71 = vector.shape_cast %70 : vector<128xf32> to vector<1x128xf32>
    %72 = arith.mulf %27, %27 : vector<16x128xf32>
    %cst_39 = arith.constant dense<0.000000e+00> : vector<128xf32>
    %73 = vector.multi_reduction <add>, %72, %cst_39 [0] : vector<16x128xf32> to vector<128xf32>
    %74 = vector.shape_cast %73 : vector<128xf32> to vector<1x128xf32>
    %cst_40 = arith.constant dense<0.000000e+00> : vector<1x8xf32>
    %75 = tpu.matmul %71, %48, %cst_40 {dimension_numbers = #tpu.dot_dimension_numbers<[1], [0], [0], [1], [0, 0, 1, 1], [], []>} : vector<1x128xf32>, vector<128x8xf32>, vector<1x8xf32> -> vector<1x8xf32>
    %cst_41 = arith.constant 3.906250e-03 : f32
    %76 = vector.broadcast %cst_41 : f32 to vector<1x8xf32>
    %77 = arith.mulf %75, %76 : vector<1x8xf32>
    %cst_42 = arith.constant dense<0.000000e+00> : vector<1x8xf32>
    %78 = tpu.matmul %74, %48, %cst_42 {dimension_numbers = #tpu.dot_dimension_numbers<[1], [0], [0], [1], [0, 0, 1, 1], [], []>} : vector<1x128xf32>, vector<128x8xf32>, vector<1x8xf32> -> vector<1x8xf32>
    %cst_43 = arith.constant 3.906250e-03 : f32
    %79 = vector.broadcast %cst_43 : f32 to vector<1x8xf32>
    %80 = arith.mulf %78, %79 : vector<1x8xf32>
    %81 = arith.mulf %77, %77 : vector<1x8xf32>
    %82 = arith.subf %80, %81 : vector<1x8xf32>
    %cst_44 = arith.constant 9.99999974E-6 : f32
    %83 = vector.broadcast %cst_44 : f32 to vector<1x8xf32>
    %84 = arith.addf %82, %83 : vector<1x8xf32>
    %85 = math.rsqrt %84 : vector<1x8xf32>
    %cst_45 = arith.constant dense<0.000000e+00> : vector<1x128xf32>
    %86 = tpu.matmul %77, %69, %cst_45 {dimension_numbers = #tpu.dot_dimension_numbers<[1], [0], [0], [1], [0, 0, 1, 1], [], []>} : vector<1x8xf32>, vector<8x128xf32>, vector<1x128xf32> -> vector<1x128xf32>
    %cst_46 = arith.constant dense<0.000000e+00> : vector<1x128xf32>
    %87 = tpu.matmul %85, %69, %cst_46 {dimension_numbers = #tpu.dot_dimension_numbers<[1], [0], [0], [1], [0, 0, 1, 1], [], []>} : vector<1x8xf32>, vector<8x128xf32>, vector<1x128xf32> -> vector<1x128xf32>
    %88 = vector.broadcast %86 : vector<1x128xf32> to vector<16x128xf32>
    %89 = arith.subf %27, %88 : vector<16x128xf32>
    %90 = vector.broadcast %87 : vector<1x128xf32> to vector<16x128xf32>
    %91 = arith.mulf %89, %90 : vector<16x128xf32>
    %cst_47 = arith.constant 0.000000e+00 : f32
    %92 = vector.broadcast %cst_47 : f32 to vector<16x128xf32>
    %93 = arith.maximumf %91, %92 : vector<16x128xf32>
    %cst_48 = arith.constant 0.000000e+00 : f32
    %94 = vector.broadcast %cst_48 : f32 to vector<1x144xf32>
    %c0_49 = arith.constant 0 : index
    %c0_50 = arith.constant 0 : index
    %95 = vector.load %arg8[%c0_49, %c0_50] : memref<18x144xf32, #tpu.memory_space<vmem>>, vector<1x144xf32>
    tpu.vector_store %arg8[%c0_49, %c0_50], %94 {strides = array<i32>} : memref<18x144xf32, #tpu.memory_space<vmem>>, vector<1x144xf32>,
    %c17_51 = arith.constant 17 : index
    %c0_52 = arith.constant 0 : index
    %96 = vector.load %arg8[%c17_51, %c0_52] : memref<18x144xf32, #tpu.memory_space<vmem>>, vector<1x144xf32>
    tpu.vector_store %arg8[%c17_51, %c0_52], %94 {strides = array<i32>} : memref<18x144xf32, #tpu.memory_space<vmem>>, vector<1x144xf32>,
    %cst_53 = arith.constant 0.000000e+00 : f32
    %97 = vector.broadcast %cst_53 : f32 to vector<16x8xf32>
    %c1_54 = arith.constant 1 : index
    %c0_55 = arith.constant 0 : index
    %98 = vector.load %arg8[%c1_54, %c0_55] : memref<18x144xf32, #tpu.memory_space<vmem>>, vector<16x8xf32>
    tpu.vector_store %arg8[%c1_54, %c0_55], %97 {strides = array<i32>} : memref<18x144xf32, #tpu.memory_space<vmem>>, vector<16x8xf32>,
    %c1_56 = arith.constant 1 : index
    %c136 = arith.constant 136 : index
    %99 = vector.load %arg8[%c1_56, %c136] : memref<18x144xf32, #tpu.memory_space<vmem>>, vector<16x8xf32>
    tpu.vector_store %arg8[%c1_56, %c136], %97 {strides = array<i32>} : memref<18x144xf32, #tpu.memory_space<vmem>>, vector<16x8xf32>,
    %c1_57 = arith.constant 1 : index
    %c8 = arith.constant 8 : index
    %100 = vector.load %arg8[%c1_57, %c8] : memref<18x144xf32, #tpu.memory_space<vmem>>, vector<16x128xf32>
    tpu.vector_store %arg8[%c1_57, %c8], %93 {strides = array<i32>} : memref<18x144xf32, #tpu.memory_space<vmem>>, vector<16x128xf32>,
    %cst_58 = arith.constant 0.000000e+00 : f32
    %101 = vector.broadcast %cst_58 : f32 to vector<16x128xf32>
    %c0_59 = arith.constant 0 : index
    %c0_60 = arith.constant 0 : index
    %102 = vector.load %arg8[%c0_59, %c0_60] : memref<18x144xf32, #tpu.memory_space<vmem>>, vector<16x144xf32>
    %c0_61 = arith.constant 0 : index
    %c0_62 = arith.constant 0 : index
    %c0_63 = arith.constant 0 : index
    %103 = vector.load %arg4[%c0_61, %c0_62, %c0_63] : memref<3x144x128xf32, #tpu.memory_space<vmem>>, vector<1x144x128xf32>
    %104 = vector.shape_cast %103 : vector<1x144x128xf32> to vector<144x128xf32>
    %cst_64 = arith.constant dense<0.000000e+00> : vector<16x128xf32>
    %105 = tpu.matmul %102, %104, %cst_64 {dimension_numbers = #tpu.dot_dimension_numbers<[1], [0], [0], [1], [0, 0, 1, 1], [], []>} : vector<16x144xf32>, vector<144x128xf32>, vector<16x128xf32> -> vector<16x128xf32>
    %106 = arith.addf %101, %105 : vector<16x128xf32>
    %c1_65 = arith.constant 1 : index
    %c0_66 = arith.constant 0 : index
    %107 = vector.load %arg8[%c1_65, %c0_66] : memref<18x144xf32, #tpu.memory_space<vmem>>, vector<16x144xf32>
    %c1_67 = arith.constant 1 : index
    %c0_68 = arith.constant 0 : index
    %c0_69 = arith.constant 0 : index
    %108 = vector.load %arg4[%c1_67, %c0_68, %c0_69] : memref<3x144x128xf32, #tpu.memory_space<vmem>>, vector<1x144x128xf32>
    %109 = vector.shape_cast %108 : vector<1x144x128xf32> to vector<144x128xf32>
    %cst_70 = arith.constant dense<0.000000e+00> : vector<16x128xf32>
    %110 = tpu.matmul %107, %109, %cst_70 {dimension_numbers = #tpu.dot_dimension_numbers<[1], [0], [0], [1], [0, 0, 1, 1], [], []>} : vector<16x144xf32>, vector<144x128xf32>, vector<16x128xf32> -> vector<16x128xf32>
    %111 = arith.addf %106, %110 : vector<16x128xf32>
    %c2_71 = arith.constant 2 : index
    %c0_72 = arith.constant 0 : index
    %112 = vector.load %arg8[%c2_71, %c0_72] : memref<18x144xf32, #tpu.memory_space<vmem>>, vector<16x144xf32>
    %c2_73 = arith.constant 2 : index
    %c0_74 = arith.constant 0 : index
    %c0_75 = arith.constant 0 : index
    %113 = vector.load %arg4[%c2_73, %c0_74, %c0_75] : memref<3x144x128xf32, #tpu.memory_space<vmem>>, vector<1x144x128xf32>
    %114 = vector.shape_cast %113 : vector<1x144x128xf32> to vector<144x128xf32>
    %cst_76 = arith.constant dense<0.000000e+00> : vector<16x128xf32>
    %115 = tpu.matmul %112, %114, %cst_76 {dimension_numbers = #tpu.dot_dimension_numbers<[1], [0], [0], [1], [0, 0, 1, 1], [], []>} : vector<16x144xf32>, vector<144x128xf32>, vector<16x128xf32> -> vector<16x128xf32>
    %116 = arith.addf %111, %115 : vector<16x128xf32>
    %c0_77 = arith.constant 0 : index
    %c0_78 = arith.constant 0 : index
    %117 = vector.load %arg5[%c0_77, %c0_78] : memref<1x128xf32, #tpu.memory_space<vmem>>, vector<1x128xf32>
    %118 = vector.broadcast %117 : vector<1x128xf32> to vector<16x128xf32>
    %119 = arith.addf %116, %118 : vector<16x128xf32>
    %120 = tpu.iota {dimensions = array<i32: 0>} : vector<128x8xi32>
    %c8_i32_79 = arith.constant 8 : i32
    %c0_i32_80 = arith.constant 0 : i32
    %121 = arith.cmpi eq, %c8_i32_79, %c0_i32_80 : i32
    %c1_i32_81 = arith.constant 1 : i32
    %122 = arith.select %121, %c1_i32_81, %c8_i32_79 : i32
    %123 = vector.broadcast %122 : i32 to vector<128x8xi32>
    %124 = arith.remsi %120, %123 : vector<128x8xi32>
    %c0_i32_82 = arith.constant 0 : i32
    %125 = vector.broadcast %c0_i32_82 : i32 to vector<128x8xi32>
    %126 = arith.cmpi ne, %124, %125 : vector<128x8xi32>
    %c0_i32_83 = arith.constant 0 : i32
    %127 = vector.broadcast %c0_i32_83 : i32 to vector<128x8xi32>
    %128 = arith.cmpi slt, %124, %127 : vector<128x8xi32>
    %c0_i32_84 = arith.constant 0 : i32
    %129 = arith.cmpi slt, %122, %c0_i32_84 : i32
    %130 = vector.broadcast %129 : i1 to vector<128x8xi1>
    %131 = vector.broadcast %130 : vector<128x8xi1> to vector<128x8xi1>
    %132 = arith.xori %128, %131 : vector<128x8xi1>
    %133 = arith.andi %132, %126 : vector<128x8xi1>
    %134 = vector.broadcast %122 : i32 to vector<128x8xi32>
    %135 = arith.addi %124, %134 : vector<128x8xi32>
    %136 = arith.select %133, %135, %124 : vector<128x8xi1>, vector<128x8xi32>
    %137 = tpu.iota {dimensions = array<i32: 1>} : vector<128x8xi32>
    %138 = arith.cmpi eq, %136, %137 : vector<128x8xi32>
    %139 = arith.extui %138 : vector<128x8xi1> to vector<128x8xi32>
    %140 = arith.sitofp %139 : vector<128x8xi32> to vector<128x8xf32>
    %141 = tpu.iota {dimensions = array<i32: 0>} : vector<8x128xi32>
    %142 = tpu.iota {dimensions = array<i32: 1>} : vector<8x128xi32>
    %c8_i32_85 = arith.constant 8 : i32
    %c0_i32_86 = arith.constant 0 : i32
    %143 = arith.cmpi eq, %c8_i32_85, %c0_i32_86 : i32
    %c1_i32_87 = arith.constant 1 : i32
    %144 = arith.select %143, %c1_i32_87, %c8_i32_85 : i32
    %145 = vector.broadcast %144 : i32 to vector<8x128xi32>
    %146 = arith.remsi %142, %145 : vector<8x128xi32>
    %c0_i32_88 = arith.constant 0 : i32
    %147 = vector.broadcast %c0_i32_88 : i32 to vector<8x128xi32>
    %148 = arith.cmpi ne, %146, %147 : vector<8x128xi32>
    %c0_i32_89 = arith.constant 0 : i32
    %149 = vector.broadcast %c0_i32_89 : i32 to vector<8x128xi32>
    %150 = arith.cmpi slt, %146, %149 : vector<8x128xi32>
    %c0_i32_90 = arith.constant 0 : i32
    %151 = arith.cmpi slt, %144, %c0_i32_90 : i32
    %152 = vector.broadcast %151 : i1 to vector<8x128xi1>
    %153 = vector.broadcast %152 : vector<8x128xi1> to vector<8x128xi1>
    %154 = arith.xori %150, %153 : vector<8x128xi1>
    %155 = arith.andi %154, %148 : vector<8x128xi1>
    %156 = vector.broadcast %144 : i32 to vector<8x128xi32>
    %157 = arith.addi %146, %156 : vector<8x128xi32>
    %158 = arith.select %155, %157, %146 : vector<8x128xi1>, vector<8x128xi32>
    %159 = arith.cmpi eq, %141, %158 : vector<8x128xi32>
    %160 = arith.extui %159 : vector<8x128xi1> to vector<8x128xi32>
    %161 = arith.sitofp %160 : vector<8x128xi32> to vector<8x128xf32>
    %cst_91 = arith.constant dense<0.000000e+00> : vector<128xf32>
    %162 = vector.multi_reduction <add>, %119, %cst_91 [0] : vector<16x128xf32> to vector<128xf32>
    %163 = vector.shape_cast %162 : vector<128xf32> to vector<1x128xf32>
    %164 = arith.mulf %119, %119 : vector<16x128xf32>
    %cst_92 = arith.constant dense<0.000000e+00> : vector<128xf32>
    %165 = vector.multi_reduction <add>, %164, %cst_92 [0] : vector<16x128xf32> to vector<128xf32>
    %166 = vector.shape_cast %165 : vector<128xf32> to vector<1x128xf32>
    %cst_93 = arith.constant dense<0.000000e+00> : vector<1x8xf32>
    %167 = tpu.matmul %163, %140, %cst_93 {dimension_numbers = #tpu.dot_dimension_numbers<[1], [0], [0], [1], [0, 0, 1, 1], [], []>} : vector<1x128xf32>, vector<128x8xf32>, vector<1x8xf32> -> vector<1x8xf32>
    %cst_94 = arith.constant 3.906250e-03 : f32
    %168 = vector.broadcast %cst_94 : f32 to vector<1x8xf32>
    %169 = arith.mulf %167, %168 : vector<1x8xf32>
    %cst_95 = arith.constant dense<0.000000e+00> : vector<1x8xf32>
    %170 = tpu.matmul %166, %140, %cst_95 {dimension_numbers = #tpu.dot_dimension_numbers<[1], [0], [0], [1], [0, 0, 1, 1], [], []>} : vector<1x128xf32>, vector<128x8xf32>, vector<1x8xf32> -> vector<1x8xf32>
    %cst_96 = arith.constant 3.906250e-03 : f32
    %171 = vector.broadcast %cst_96 : f32 to vector<1x8xf32>
    %172 = arith.mulf %170, %171 : vector<1x8xf32>
    %173 = arith.mulf %169, %169 : vector<1x8xf32>
    %174 = arith.subf %172, %173 : vector<1x8xf32>
    %cst_97 = arith.constant 9.99999974E-6 : f32
    %175 = vector.broadcast %cst_97 : f32 to vector<1x8xf32>
    %176 = arith.addf %174, %175 : vector<1x8xf32>
    %177 = math.rsqrt %176 : vector<1x8xf32>
    %cst_98 = arith.constant dense<0.000000e+00> : vector<1x128xf32>
    %178 = tpu.matmul %169, %161, %cst_98 {dimension_numbers = #tpu.dot_dimension_numbers<[1], [0], [0], [1], [0, 0, 1, 1], [], []>} : vector<1x8xf32>, vector<8x128xf32>, vector<1x128xf32> -> vector<1x128xf32>
    %cst_99 = arith.constant dense<0.000000e+00> : vector<1x128xf32>
    %179 = tpu.matmul %177, %161, %cst_99 {dimension_numbers = #tpu.dot_dimension_numbers<[1], [0], [0], [1], [0, 0, 1, 1], [], []>} : vector<1x8xf32>, vector<8x128xf32>, vector<1x128xf32> -> vector<1x128xf32>
    %180 = vector.broadcast %178 : vector<1x128xf32> to vector<16x128xf32>
    %181 = arith.subf %119, %180 : vector<16x128xf32>
    %182 = vector.broadcast %179 : vector<1x128xf32> to vector<16x128xf32>
    %183 = arith.mulf %181, %182 : vector<16x128xf32>
    %cst_100 = arith.constant 0.000000e+00 : f32
    %184 = vector.broadcast %cst_100 : f32 to vector<16x128xf32>
    %185 = arith.maximumf %183, %184 : vector<16x128xf32>
    %c0_101 = arith.constant 0 : index
    %c0_102 = arith.constant 0 : index
    %c0_103 = arith.constant 0 : index
    %186 = vector.load %arg6[%c0_101, %c0_102, %c0_103] : memref<1x16x128xf32, #tpu.memory_space<vmem>>, vector<1x16x128xf32>
    %187 = vector.shape_cast %186 : vector<1x16x128xf32> to vector<16x128xf32>
    %188 = vector.shape_cast %185 : vector<16x128xf32> to vector<1x16x128xf32>
    tpu.vector_store %arg6[%c0_101, %c0_102, %c0_103], %188 {strides = array<i32>} : memref<1x16x128xf32, #tpu.memory_space<vmem>>, vector<1x16x128xf32>,
    return
  }
  func.func @transform_0(%arg0: i32) -> (i32, i32, i32) {
    %c0_i32 = arith.constant 0 : i32
    %c0_i32_0 = arith.constant 0 : i32
    %c0_i32_1 = arith.constant 0 : i32
    return %arg0, %c0_i32, %c0_i32_0 : i32, i32, i32
  }
  func.func @transform_1(%arg0: i32) -> (i32, i32, i32) {
    %c0_i32 = arith.constant 0 : i32
    %c0_i32_0 = arith.constant 0 : i32
    %c0_i32_1 = arith.constant 0 : i32
    %c0_i32_2 = arith.constant 0 : i32
    return %c0_i32, %c0_i32_0, %c0_i32_1 : i32, i32, i32
  }
  func.func @transform_2(%arg0: i32) -> (i32, i32) {
    %c0_i32 = arith.constant 0 : i32
    %c0_i32_0 = arith.constant 0 : i32
    %c0_i32_1 = arith.constant 0 : i32
    return %c0_i32, %c0_i32_0 : i32, i32
  }
  func.func @transform_3(%arg0: i32) -> (i32, i32, i32) {
    %c0_i32 = arith.constant 0 : i32
    %c0_i32_0 = arith.constant 0 : i32
    %c0_i32_1 = arith.constant 0 : i32
    %c0_i32_2 = arith.constant 0 : i32
    return %c0_i32, %c0_i32_0, %c0_i32_1 : i32, i32, i32
  }
  func.func @transform_4(%arg0: i32) -> (i32, i32) {
    %c0_i32 = arith.constant 0 : i32
    %c0_i32_0 = arith.constant 0 : i32
    %c0_i32_1 = arith.constant 0 : i32
    return %c0_i32, %c0_i32_0 : i32, i32
  }
  func.func @transform_5(%arg0: i32) -> (i32, i32, i32) {
    %c0_i32 = arith.constant 0 : i32
    %c0_i32_0 = arith.constant 0 : i32
    %c0_i32_1 = arith.constant 0 : i32
    return %arg0, %c0_i32, %c0_i32_0 : i32, i32, i32
  }
}

</mosaic_0001>

<llo_original>
// kernel: double_conv.1
$region0: #{double_conv.1}
  #allocation0 [shape = 'u32[]', space=smem, size = 0x4, offset = 0x4, fixed_abs, tag = 'smem constant byte address 0x4 - core index']
  #allocation1 [shape = 'u32[72,128]{1,0:T(1,128)}', space=vmem, size = 0x9000, scoped, tag = 'internal scratch']
  #allocation2 [shape = 'f32[18,72]{1,0:T(8,128)}', space=vmem, size = 0x3000, scoped, tag = 'scratch operand']
  #allocation3 [shape = 'f32[18,144]{1,0:T(8,128)}', space=vmem, size = 0x6000, scoped, tag = 'scratch operand']
  %s0 = inlined_call_operand.vmem [shape: f32[2,16,64], index: 0, kind: input, shape index: {}]
  %s1 = inlined_call_operand.vmem [shape: f32[3,72,128], index: 1, kind: input, shape index: {}]
  %s2 = inlined_call_operand.vmem [shape: f32[1,128], index: 2, kind: input, shape index: {}]
  %s3 = inlined_call_operand.vmem [shape: f32[3,144,128], index: 3, kind: input, shape index: {}]
  %s4 = inlined_call_operand.vmem [shape: f32[1,128], index: 4, kind: input, shape index: {}]
  %s5 = inlined_call_operand.vmem [shape: f32[2,16,128], index: 5, kind: output, shape index: {}]
  %s6 = sld [smem:[#allocation0]]
  $region53: #{double_conv.1} parent=0
    _
  %s8 = ssub.s32 1, %s6
  %s9 = scalar_select 0, %s8, %s6
  loop: start=0, step=1, limit=4
  $region2: #{double_conv.1} parent=0 // loop_pre_header
    _
  $region3: #{double_conv.1} parent=0 // loop_header
    %s11 = sphi 0, %s15
    %p12 = scmp.ge.s32.totalorder %s11, 4
    %s21 = sphi 0, %s23
    %s24 = sphi 0, %s21
    %s25 = sphi 0, %s24
    %s41 = sphi 0, %s25
    %s45 = sphi 0, %s45
    %s47 = sphi 0, %s45
    %s48 = sphi 0, %s47
    %s62 = sphi 0, %s48
    %s66 = sphi 0, %s66
    %s68 = sphi 0, %s66
    %s69 = sphi 0, %s68
    %s83 = sphi 0, %s69
    %s87 = sphi 0, %s87
    %s89 = sphi 0, %s87
    %s90 = sphi 0, %s89
    %s104 = sphi 0, %s90
    %s108 = sphi 0, %s108
    %s110 = sphi 0, %s108
    %s111 = sphi 0, %s110
    %s125 = sphi 0, %s111
    %s131 = sphi 0, %s133
    %s134 = sphi 0, %s131
    %s135 = sphi 0, %s134
    %s151 = sphi 0, %s135
  $region4: #{double_conv.1} parent=0 // loop_header_branch
    %14 = sbr.rel (%p12) target = $region8
  $region5: #{double_conv.1} parent=0 // loop_body
    %s16 = ssub.s32 %s11, 1
    %s17 = ssub.s32 %s11, 2
    %s18 = sadd.s32 %s11, 1
    %s19 = ssub.s32 %s11, %s18
    %p20 = scmp.eq.s32.totalorder %s19, 0
    %s22 = sadd.s32 %s21, 1
    %s23 = scalar_select %p20, %s21, %s22
    %p26 = pneg %p20
    %p27 = scmp.eq.s32.totalorder %s11, 1
    %p28 = por %p26, %p27
    %p29 = scmp.ne.s32.totalorder %s21, %s24
    %p30 = scmp.eq.s32.totalorder %s11, 0
    %p31 = por %p29, %p30
    %p32 = scmp.ne.s32.totalorder %s21, %s24
    %p33 = scmp.eq.s32.totalorder %s16, 1
    %p34 = por %p32, %p33
    %p35 = scmp.ne.s32.totalorder %s24, %s25
    %p36 = scmp.eq.s32.totalorder %s16, 0
    %p37 = por %p35, %p36
    %p38 = scmp.ne.s32.totalorder %s24, %s25
    %p39 = scmp.eq.s32.totalorder %s17, 1
    %p40 = por %p38, %p39
    %p42 = scmp.ne.s32.totalorder %s25, %s41
    %p43 = scmp.eq.s32.totalorder %s17, 0
    %p44 = por %p42, %p43
    %s46 = sadd.s32 %s45, 1
    %p49 = scmp.eq.s32.totalorder %s11, 1
    %p50 = scmp.ne.s32.totalorder %s45, %s47
    %p51 = scmp.eq.s32.totalorder %s11, 0
    %p52 = por %p50, %p51
    %p53 = scmp.ne.s32.totalorder %s45, %s47
    %p54 = scmp.eq.s32.totalorder %s16, 1
    %p55 = por %p53, %p54
    %p56 = scmp.ne.s32.totalorder %s47, %s48
    %p57 = scmp.eq.s32.totalorder %s16, 0
    %p58 = por %p56, %p57
    %p59 = scmp.ne.s32.totalorder %s47, %s48
    %p60 = scmp.eq.s32.totalorder %s17, 1
    %p61 = por %p59, %p60
    %p63 = scmp.ne.s32.totalorder %s48, %s62
    %p64 = scmp.eq.s32.totalorder %s17, 0
    %p65 = por %p63, %p64
    %s67 = sadd.s32 %s66, 1
    %p70 = scmp.eq.s32.totalorder %s11, 1
    %p71 = scmp.ne.s32.totalorder %s66, %s68
    %p72 = scmp.eq.s32.totalorder %s11, 0
    %p73 = por %p71, %p72
    %p74 = scmp.ne.s32.totalorder %s66, %s68
    %p75 = scmp.eq.s32.totalorder %s16, 1
    %p76 = por %p74, %p75
    %p77 = scmp.ne.s32.totalorder %s68, %s69
    %p78 = scmp.eq.s32.totalorder %s16, 0
    %p79 = por %p77, %p78
    %p80 = scmp.ne.s32.totalorder %s68, %s69
    %p81 = scmp.eq.s32.totalorder %s17, 1
    %p82 = por %p80, %p81
    %p84 = scmp.ne.s32.totalorder %s69, %s83
    %p85 = scmp.eq.s32.totalorder %s17, 0
    %p86 = por %p84, %p85
    %s88 = sadd.s32 %s87, 1
    %p91 = scmp.eq.s32.totalorder %s11, 1
    %p92 = scmp.ne.s32.totalorder %s87, %s89
    %p93 = scmp.eq.s32.totalorder %s11, 0
    %p94 = por %p92, %p93
    %p95 = scmp.ne.s32.totalorder %s87, %s89
    %p96 = scmp.eq.s32.totalorder %s16, 1
    %p97 = por %p95, %p96
    %p98 = scmp.ne.s32.totalorder %s89, %s90
    %p99 = scmp.eq.s32.totalorder %s16, 0
    %p100 = por %p98, %p99
    %p101 = scmp.ne.s32.totalorder %s89, %s90
    %p102 = scmp.eq.s32.totalorder %s17, 1
    %p103 = por %p101, %p102
    %p105 = scmp.ne.s32.totalorder %s90, %s104
    %p106 = scmp.eq.s32.totalorder %s17, 0
    %p107 = por %p105, %p106
    %s109 = sadd.s32 %s108, 1
    %p112 = scmp.eq.s32.totalorder %s11, 1
    %p113 = scmp.ne.s32.totalorder %s108, %s110
    %p114 = scmp.eq.s32.totalorder %s11, 0
    %p115 = por %p113, %p114
    %p116 = scmp.ne.s32.totalorder %s108, %s110
    %p117 = scmp.eq.s32.totalorder %s16, 1
    %p118 = por %p116, %p117
    %p119 = scmp.ne.s32.totalorder %s110, %s111
    %p120 = scmp.eq.s32.totalorder %s16, 0
    %p121 = por %p119, %p120
    %p122 = scmp.ne.s32.totalorder %s110, %s111
    %p123 = scmp.eq.s32.totalorder %s17, 1
    %p124 = por %p122, %p123
    %p126 = scmp.ne.s32.totalorder %s111, %s125
    %p127 = scmp.eq.s32.totalorder %s17, 0
    %p128 = por %p126, %p127
    %s129 = ssub.s32 %s11, %s18
    %p130 = scmp.eq.s32.totalorder %s129, 0
    %s132 = sadd.s32 %s131, 1
    %s133 = scalar_select %p130, %s131, %s132
    %p136 = pneg %p130
    %p137 = scmp.eq.s32.totalorder %s11, 1
    %p138 = por %p136, %p137
    %p139 = scmp.ne.s32.totalorder %s131, %s134
    %p140 = scmp.eq.s32.totalorder %s11, 0
    %p141 = por %p139, %p140
    %p142 = scmp.ne.s32.totalorder %s131, %s134
    %p143 = scmp.eq.s32.totalorder %s16, 1
    %p144 = por %p142, %p143
    %p145 = scmp.ne.s32.totalorder %s134, %s135
    %p146 = scmp.eq.s32.totalorder %s16, 0
    %p147 = por %p145, %p146
    %p148 = scmp.ne.s32.totalorder %s134, %s135
    %p149 = scmp.eq.s32.totalorder %s17, 1
    %p150 = por %p148, %p149
    %p152 = scmp.ne.s32.totalorder %s135, %s151
    %p153 = scmp.eq.s32.totalorder %s17, 0
    %p154 = por %p152, %p153
    %p155 = scmp.le.s32.totalorder 1, %s11
    %p156 = scmp.lt.s32.totalorder %s11, 3
    %p157 = pnand %p155, %p156
    %p158 = pneg %p157
    // Predicated region
    $region9: #{double_conv.1} parent=5 // pred_check
      _
    $region10: #{double_conv.1} parent=5 // pred_check_branch
      %160 = sbr.rel (%p157) target = $region12
    $region11: #{double_conv.1} parent=5 // pred_region
      %s161 = ssub.s32 %s11, 1
      // Predicated region
      $region13: #{double_conv.1} parent=11 // pred_check
        %p162 = pneg %p58
      $region14: #{double_conv.1} parent=11 // pred_check_branch
        %164 = sbr.rel (%p162) target = $region16
      $region15: #{double_conv.1} parent=11 // pred_region
        _
      $region16: #{double_conv.1} parent=11 // pred_fallthru
        _
      // Predicated region
      $region17: #{double_conv.1} parent=11 // pred_check
        %p165 = pneg %p79
      $region18: #{double_conv.1} parent=11 // pred_check_branch
        %167 = sbr.rel (%p165) target = $region20
      $region19: #{double_conv.1} parent=11 // pred_region
        _
      $region20: #{double_conv.1} parent=11 // pred_fallthru
        _
      // Predicated region
      $region21: #{double_conv.1} parent=11 // pred_check
        %p168 = pneg %p100
      $region22: #{double_conv.1} parent=11 // pred_check_branch
        %170 = sbr.rel (%p168) target = $region24
      $region23: #{double_conv.1} parent=11 // pred_region
        _
      $region24: #{double_conv.1} parent=11 // pred_fallthru
        _
      // Predicated region
      $region25: #{double_conv.1} parent=11 // pred_check
        %p171 = pneg %p121
      $region26: #{double_conv.1} parent=11 // pred_check_branch
        %173 = sbr.rel (%p171) target = $region28
      $region27: #{double_conv.1} parent=11 // pred_region
        _
      $region28: #{double_conv.1} parent=11 // pred_fallthru
        _
    $region12: #{double_conv.1} parent=5 // pred_fallthru
      _
    %p174 = scmp.lt.s32.totalorder %s11, 2
    // Predicated region
    $region29: #{double_conv.1} parent=5 // pred_check
      %p175 = pneg %p174
    $region30: #{double_conv.1} parent=5 // pred_check_branch
      %177 = sbr.rel (%p175) target = $region32
    $region31: #{double_conv.1} parent=5 // pred_region
      // Predicated region
      $region33: #{double_conv.1} parent=31 // pred_check
        %p178 = pneg %p31
      $region34: #{double_conv.1} parent=31 // pred_check_branch
        %180 = sbr.rel (%p178) target = $region36
      $region35: #{double_conv.1} parent=31 // pred_region
        %p181 = scmp.lt.s32.totalorder %s11, 1
        %s182 = scalar_select %p181, %s11, 1
        %s183 = smul.addr %s182, 2
        %s184 = smul.addr %s183, 8
        %s185 = scalar_lea.vmem %s0, %s184
      $region36: #{double_conv.1} parent=31 // pred_fallthru
        _
    $region32: #{double_conv.1} parent=5 // pred_fallthru
      _
    %p186 = scmp.le.s32.totalorder 1, %s11
    %p187 = scmp.lt.s32.totalorder %s11, 3
    %p188 = pnand %p186, %p187
    %p189 = pneg %p188
    // Predicated region
    $region37: #{double_conv.1} parent=5 // pred_check
      _
    $region38: #{double_conv.1} parent=5 // pred_check_branch
      %191 = sbr.rel (%p188) target = $region40
    $region39: #{double_conv.1} parent=5 // pred_region
      %s192 = ssub.s32 %s11, 1
      %p193 = scmp.lt.s32.totalorder %s16, 1
      %s194 = scalar_select %p193, %s16, 1
      %s195 = smul.addr %s194, 2
      %s196 = smul.addr %s195, 8
      %s197 = scalar_lea.vmem %s0, %s196
      %p198 = pneg %p37
      %p199 = pneg %p34
      %p200 = pneg %p58
      %p201 = pneg %p55
      %p202 = pneg %p79
      %p203 = pneg %p76
      %p204 = pneg %p100
      %p205 = pneg %p97
      %p206 = pneg %p121
      %p207 = pneg %p118
      %p208 = pneg %p147
      %p209 = pneg %p144
      %p210 = scmp.lt.s32.totalorder %s16, 1
      %s211 = scalar_select %p210, %s16, 1
      %s212 = smul.addr %s211, 2
      %s213 = smul.addr %s212, 8
      %s214 = scalar_lea.vmem %s5, %s213
      %p215 = scmp.lt.s32.totalorder %s16, 1
      %s216 = scalar_select %p215, %s16, 1
      %s217 = smul.addr %s216, 2
      %s218 = smul.addr %s217, 8
      %s219 = scalar_lea.vmem %s0, %s218
      %p220 = scmp.lt.s32.totalorder %s16, 1
      %s221 = scalar_select %p220, %s16, 1
      %s222 = smul.addr %s221, 2
      %s223 = smul.addr %s222, 8
      %s224 = scalar_lea.vmem %s5, %s223
      %vm225 = vcmask 581632
      %226 = vst.msk [vmem:[#allocation2] sm:$0x1] %vm225, 0.0
      %227 = vst.msk [vmem:[#allocation2 + $0x11] sm:$0x1] %vm225, 0.0
      %vm228 = vcmask 31744
      %229 = vst.msk [vmem:[#allocation2 + $0x1] sm:$0xff] %vm228, 0.0
      %230 = vst.msk [vmem:[#allocation2 + $0x9] sm:$0xff] %vm228, 0.0
      %vm231 = vcmask 589344
      %232 = vst.msk [vmem:[#allocation2 + $0x1] sm:$0xff] %vm231, 0.0
      %233 = vst.msk [vmem:[#allocation2 + $0x9] sm:$0xff] %vm231, 0.0
      %v234 = vld [vmem:[%s219] sm:$0xff]
      %v235 = vld [vmem:[%s219 + $0x8] sm:$0xff]
      %238 = vrot.lane.b32.xlu0 %v234, 4
      %v239 = vpop.permute.xlu0 %238
      %240 = vrot.lane.b32.xlu0 %v235, 4
      %v241 = vpop.permute.xlu0 %240
      %vm244 = vcmask 556064
      %245 = vst.msk [vmem:[#allocation2 + $0x1] sm:$0xff] %vm244, %v239
      %246 = vst.msk [vmem:[#allocation2 + $0x9] sm:$0xff] %vm244, %v241
      %v247 = vld [vmem:[#allocation2] sm:$0xff]
      %v248 = vld [vmem:[#allocation2 + $0x8] sm:$0xff]
      %v249 = vld [vmem:[%s1] sm:$0xff]
      %v250 = vld [vmem:[%s1 + $0x8] sm:$0xff]
      %v251 = vld [vmem:[%s1 + $0x10] sm:$0xff]
      %v252 = vld [vmem:[%s1 + $0x18] sm:$0xff]
      %v253 = vld [vmem:[%s1 + $0x20] sm:$0xff]
      %v254 = vld [vmem:[%s1 + $0x28] sm:$0xff]
      %v255 = vld [vmem:[%s1 + $0x30] sm:$0xff]
      %v256 = vld [vmem:[%s1 + $0x38] sm:$0xff]
      %v257 = vld [vmem:[%s1 + $0x40] sm:$0xff]
      %v258 = vld [vmem:[#allocation2 + $0x1] sm:$0xff]
      %v259 = vld [vmem:[#allocation2 + $0x9] sm:$0xff]
      %s260 = scalar_lea.vmem %s1, 72
      %v261 = vld [vmem:[%s260] sm:$0xff]
      %v262 = vld [vmem:[%s260 + $0x8] sm:$0xff]
      %v263 = vld [vmem:[%s260 + $0x10] sm:$0xff]
      %v264 = vld [vmem:[%s260 + $0x18] sm:$0xff]
      %v265 = vld [vmem:[%s260 + $0x20] sm:$0xff]
      %v266 = vld [vmem:[%s260 + $0x28] sm:$0xff]
      %v267 = vld [vmem:[%s260 + $0x30] sm:$0xff]
      %v268 = vld [vmem:[%s260 + $0x38] sm:$0xff]
      %v269 = vld [vmem:[%s260 + $0x40] sm:$0xff]
      %vm270 = vcmask 588800
      %v272 = vsel %vm270, %v258, 0
      %v275 = vsel %vm270, %v259, 0
      %277 = vmatpush.msra.mxu0 0.0
      %278 = vmatpush.msra.mxu0 0.0
      %279 = vmatpush.msra.mxu0 0.0
      %280 = vmatpush.msra.mxu0 0.0
      %281 = vmatpush.msra.mxu0 0.0
      %282 = vmatpush.msra.mxu0 0.0
      %283 = vmatpush.msra.mxu0 0.0
      %284 = vmatpush.msra.mxu0 %v269
      %285 = vmatpush.msra.mxu0 %v268
      %286 = vmatpush.msra.mxu0 %v267
      %287 = vmatpush.msra.mxu0 %v266
      %288 = vmatpush.msra.mxu0 %v265
      %289 = vmatpush.msra.mxu0 %v264
      %290 = vmatpush.msra.mxu0 %v263
      %291 = vmatpush.msra.mxu0 %v262
      %292 = vmatpush.msra.mxu0 %v261
      %293 = vmatmul.f32.gmra.mxu0 %v272
      %v294 = vpop.f32.mrf.mxu0
      %v295 = vadd.f32 0.0, %v294
      %296 = vmatmul.f32.gmra.mxu0 %v275
      %v297 = vpop.f32.mrf.mxu0
      %v298 = vadd.f32 0.0, %v297
      %299 = vdwg.mxu0
      %v301 = vsel %vm270, %v247, 0
      %v304 = vsel %vm270, %v248, 0
      %306 = vmatpush.msra.mxu0 0.0
      %307 = vmatpush.msra.mxu0 0.0
      %308 = vmatpush.msra.mxu0 0.0
      %309 = vmatpush.msra.mxu0 0.0
      %310 = vmatpush.msra.mxu0 0.0
      %311 = vmatpush.msra.mxu0 0.0
      %312 = vmatpush.msra.mxu0 0.0
      %313 = vmatpush.msra.mxu0 %v257
      %314 = vmatpush.msra.mxu0 %v256
      %315 = vmatpush.msra.mxu0 %v255
      %316 = vmatpush.msra.mxu0 %v254
      %317 = vmatpush.msra.mxu0 %v253
      %318 = vmatpush.msra.mxu0 %v252
      %319 = vmatpush.msra.mxu0 %v251
      %320 = vmatpush.msra.mxu0 %v250
      %321 = vmatpush.msra.mxu0 %v249
      %322 = vmatmul.f32.gmra.mxu0 %v301
      %v323 = vpop.f32.mrf.mxu0
      %v324 = vadd.f32 %v295, %v323
      %325 = vmatmul.f32.gmra.mxu0 %v304
      %v326 = vpop.f32.mrf.mxu0
      %v327 = vadd.f32 %v298, %v326
      %328 = vdwg.mxu0
      %v329 = vld [vmem:[#allocation2 + $0x2] sm:$0xff]
      %v330 = vld [vmem:[#allocation2 + $0xa] sm:$0xff]
      %s331 = scalar_lea.vmem %s1, 144
      %v332 = vld [vmem:[%s331] sm:$0xff]
      %v333 = vld [vmem:[%s331 + $0x8] sm:$0xff]
      %v334 = vld [vmem:[%s331 + $0x10] sm:$0xff]
      %v335 = vld [vmem:[%s331 + $0x18] sm:$0xff]
      %v336 = vld [vmem:[%s331 + $0x20] sm:$0xff]
      %v337 = vld [vmem:[%s331 + $0x28] sm:$0xff]
      %v338 = vld [vmem:[%s331 + $0x30] sm:$0xff]
      %v339 = vld [vmem:[%s331 + $0x38] sm:$0xff]
      %v340 = vld [vmem:[%s331 + $0x40] sm:$0xff]
      %v342 = vsel %vm270, %v329, 0
      %v345 = vsel %vm270, %v330, 0
      %347 = vmatpush.msra.mxu0 0.0
      %348 = vmatpush.msra.mxu0 0.0
      %349 = vmatpush.msra.mxu0 0.0
      %350 = vmatpush.msra.mxu0 0.0
      %351 = vmatpush.msra.mxu0 0.0
      %352 = vmatpush.msra.mxu0 0.0
      %353 = vmatpush.msra.mxu0 0.0
      %354 = vmatpush.msra.mxu0 %v340
      %355 = vmatpush.msra.mxu0 %v339
      %356 = vmatpush.msra.mxu0 %v338
      %357 = vmatpush.msra.mxu0 %v337
      %358 = vmatpush.msra.mxu0 %v336
      %359 = vmatpush.msra.mxu0 %v335
      %360 = vmatpush.msra.mxu0 %v334
      %361 = vmatpush.msra.mxu0 %v333
      %362 = vmatpush.msra.mxu0 %v332
      %363 = vmatmul.f32.gmra.mxu0 %v342
      %v364 = vpop.f32.mrf.mxu0
      %v365 = vadd.f32 0.0, %v364
      %366 = vmatmul.f32.gmra.mxu0 %v345
      %v367 = vpop.f32.mrf.mxu0
      %v368 = vadd.f32 0.0, %v367
      %369 = vdwg.mxu0
      %v370 = vadd.f32 %v324, %v365
      %v371 = vadd.f32 %v327, %v368
      %v372 = vld [vmem:[%s2] sm:$0x1]
      %v374 = vperm.slane %v372, 0
      %v376 = vadd.f32 %v370, %v374
      %v377 = vadd.f32 %v371, %v374
      %v378 = vlaneseq
      %v379 = vshrl.u32 %v378, 7
      %v380 = vadd.s32 %v379, 8
      %v381 = vadd.s32 %v379, 16
      %v382 = vadd.s32 %v379, 24
      %v383 = vadd.s32 %v379, 32
      %v384 = vadd.s32 %v379, 40
      %v385 = vadd.s32 %v379, 48
      %v386 = vadd.s32 %v379, 56
      %v387 = vadd.s32 %v379, 64
      %v388 = vadd.s32 %v379, 72
      %v389 = vadd.s32 %v379, 80
      %v390 = vadd.s32 %v379, 88
      %v391 = vadd.s32 %v379, 96
      %v392 = vadd.s32 %v379, 104
      %v393 = vadd.s32 %v379, 112
      %v394 = vadd.s32 %v379, 120
      %vm395 = vcmp.lt.s32.totalorder %v379, 0
      %v396 = vsub.s32 0, %v379
      %v397 = vsel %vm395, %v396, %v379
      %v398 = vshrl.u32 %v397, 3
      %v399 = vand.u32 %v397, 7
      %v400 = vsub.s32 0, %v399
      %v401 = vsel %vm395, %v400, %v399
      %vm402 = vcmp.lt.s32.totalorder %v380, 0
      %v403 = vsub.s32 0, %v380
      %v404 = vsel %vm402, %v403, %v380
      %v405 = vshrl.u32 %v404, 3
      %v406 = vand.u32 %v404, 7
      %v407 = vsub.s32 0, %v406
      %v408 = vsel %vm402, %v407, %v406
      %vm409 = vcmp.lt.s32.totalorder %v381, 0
      %v410 = vsub.s32 0, %v381
      %v411 = vsel %vm409, %v410, %v381
      %v412 = vshrl.u32 %v411, 3
      %v413 = vand.u32 %v411, 7
      %v414 = vsub.s32 0, %v413
      %v415 = vsel %vm409, %v414, %v413
      %vm416 = vcmp.lt.s32.totalorder %v382, 0
      %v417 = vsub.s32 0, %v382
      %v418 = vsel %vm416, %v417, %v382
      %v419 = vshrl.u32 %v418, 3
      %v420 = vand.u32 %v418, 7
      %v421 = vsub.s32 0, %v420
      %v422 = vsel %vm416, %v421, %v420
      %vm423 = vcmp.lt.s32.totalorder %v383, 0
      %v424 = vsub.s32 0, %v383
      %v425 = vsel %vm423, %v424, %v383
      %v426 = vshrl.u32 %v425, 3
      %v427 = vand.u32 %v425, 7
      %v428 = vsub.s32 0, %v427
      %v429 = vsel %vm423, %v428, %v427
      %vm430 = vcmp.lt.s32.totalorder %v384, 0
      %v431 = vsub.s32 0, %v384
      %v432 = vsel %vm430, %v431, %v384
      %v433 = vshrl.u32 %v432, 3
      %v434 = vand.u32 %v432, 7
      %v435 = vsub.s32 0, %v434
      %v436 = vsel %vm430, %v435, %v434
      %vm437 = vcmp.lt.s32.totalorder %v385, 0
      %v438 = vsub.s32 0, %v385
      %v439 = vsel %vm437, %v438, %v385
      %v440 = vshrl.u32 %v439, 3
      %v441 = vand.u32 %v439, 7
      %v442 = vsub.s32 0, %v441
      %v443 = vsel %vm437, %v442, %v441
      %vm444 = vcmp.lt.s32.totalorder %v386, 0
      %v445 = vsub.s32 0, %v386
      %v446 = vsel %vm444, %v445, %v386
      %v447 = vshrl.u32 %v446, 3
      %v448 = vand.u32 %v446, 7
      %v449 = vsub.s32 0, %v448
      %v450 = vsel %vm444, %v449, %v448
      %vm451 = vcmp.lt.s32.totalorder %v387, 0
      %v452 = vsub.s32 0, %v387
      %v453 = vsel %vm451, %v452, %v387
      %v454 = vshrl.u32 %v453, 3
      %v455 = vand.u32 %v453, 7
      %v456 = vsub.s32 0, %v455
      %v457 = vsel %vm451, %v456, %v455
      %vm458 = vcmp.lt.s32.totalorder %v388, 0
      %v459 = vsub.s32 0, %v388
      %v460 = vsel %vm458, %v459, %v388
      %v461 = vshrl.u32 %v460, 3
      %v462 = vand.u32 %v460, 7
      %v463 = vsub.s32 0, %v462
      %v464 = vsel %vm458, %v463, %v462
      %vm465 = vcmp.lt.s32.totalorder %v389, 0
      %v466 = vsub.s32 0, %v389
      %v467 = vsel %vm465, %v466, %v389
      %v468 = vshrl.u32 %v467, 3
      %v469 = vand.u32 %v467, 7
      %v470 = vsub.s32 0, %v469
      %v471 = vsel %vm465, %v470, %v469
      %vm472 = vcmp.lt.s32.totalorder %v390, 0
      %v473 = vsub.s32 0, %v390
      %v474 = vsel %vm472, %v473, %v390
      %v475 = vshrl.u32 %v474, 3
      %v476 = vand.u32 %v474, 7
      %v477 = vsub.s32 0, %v476
      %v478 = vsel %vm472, %v477, %v476
      %vm479 = vcmp.lt.s32.totalorder %v391, 0
      %v480 = vsub.s32 0, %v391
      %v481 = vsel %vm479, %v480, %v391
      %v482 = vshrl.u32 %v481, 3
      %v483 = vand.u32 %v481, 7
      %v484 = vsub.s32 0, %v483
      %v485 = vsel %vm479, %v484, %v483
      %vm486 = vcmp.lt.s32.totalorder %v392, 0
      %v487 = vsub.s32 0, %v392
      %v488 = vsel %vm486, %v487, %v392
      %v489 = vshrl.u32 %v488, 3
      %v490 = vand.u32 %v488, 7
      %v491 = vsub.s32 0, %v490
      %v492 = vsel %vm486, %v491, %v490
      %vm493 = vcmp.lt.s32.totalorder %v393, 0
      %v494 = vsub.s32 0, %v393
      %v495 = vsel %vm493, %v494, %v393
      %v496 = vshrl.u32 %v495, 3
      %v497 = vand.u32 %v495, 7
      %v498 = vsub.s32 0, %v497
      %v499 = vsel %vm493, %v498, %v497
      %vm500 = vcmp.lt.s32.totalorder %v394, 0
      %v501 = vsub.s32 0, %v394
      %v502 = vsel %vm500, %v501, %v394
      %v503 = vshrl.u32 %v502, 3
      %v504 = vand.u32 %v502, 7
      %v505 = vsub.s32 0, %v504
      %v506 = vsel %vm500, %v505, %v504
      %vm507 = vcmp.ne.s32.totalorder %v401, 0
      %vm508 = vcmp.ne.s32.totalorder %v408, 0
      %vm509 = vcmp.ne.s32.totalorder %v415, 0
      %vm510 = vcmp.ne.s32.totalorder %v422, 0
      %vm511 = vcmp.ne.s32.totalorder %v429, 0
      %vm512 = vcmp.ne.s32.totalorder %v436, 0
      %vm513 = vcmp.ne.s32.totalorder %v443, 0
      %vm514 = vcmp.ne.s32.totalorder %v450, 0
      %vm515 = vcmp.ne.s32.totalorder %v457, 0
      %vm516 = vcmp.ne.s32.totalorder %v464, 0
      %vm517 = vcmp.ne.s32.totalorder %v471, 0
      %vm518 = vcmp.ne.s32.totalorder %v478, 0
      %vm519 = vcmp.ne.s32.totalorder %v485, 0
      %vm520 = vcmp.ne.s32.totalorder %v492, 0
      %vm521 = vcmp.ne.s32.totalorder %v499, 0
      %vm522 = vcmp.ne.s32.totalorder %v506, 0
      %vm523 = vcmp.lt.s32.totalorder %v401, 0
      %vm524 = vcmp.lt.s32.totalorder %v408, 0
      %vm525 = vcmp.lt.s32.totalorder %v415, 0
      %vm526 = vcmp.lt.s32.totalorder %v422, 0
      %vm527 = vcmp.lt.s32.totalorder %v429, 0
      %vm528 = vcmp.lt.s32.totalorder %v436, 0
      %vm529 = vcmp.lt.s32.totalorder %v443, 0
      %vm530 = vcmp.lt.s32.totalorder %v450, 0
      %vm531 = vcmp.lt.s32.totalorder %v457, 0
      %vm532 = vcmp.lt.s32.totalorder %v464, 0
      %vm533 = vcmp.lt.s32.totalorder %v471, 0
      %vm534 = vcmp.lt.s32.totalorder %v478, 0
      %vm535 = vcmp.lt.s32.totalorder %v485, 0
      %vm536 = vcmp.lt.s32.totalorder %v492, 0
      %vm537 = vcmp.lt.s32.totalorder %v499, 0
      %vm538 = vcmp.lt.s32.totalorder %v506, 0
      %vm539 = vmand %vm523, %vm507
      %vm540 = vmand %vm524, %vm508
      %vm541 = vmand %vm525, %vm509
      %vm542 = vmand %vm526, %vm510
      %vm543 = vmand %vm527, %vm511
      %vm544 = vmand %vm528, %vm512
      %vm545 = vmand %vm529, %vm513
      %vm546 = vmand %vm530, %vm514
      %vm547 = vmand %vm531, %vm515
      %vm548 = vmand %vm532, %vm516
      %vm549 = vmand %vm533, %vm517
      %vm550 = vmand %vm534, %vm518
      %vm551 = vmand %vm535, %vm519
      %vm552 = vmand %vm536, %vm520
      %vm553 = vmand %vm537, %vm521
      %vm554 = vmand %vm538, %vm522
      %v555 = vadd.s32 %v401, 8
      %v556 = vadd.s32 %v408, 8
      %v557 = vadd.s32 %v415, 8
      %v558 = vadd.s32 %v422, 8
      %v559 = vadd.s32 %v429, 8
      %v560 = vadd.s32 %v436, 8
      %v561 = vadd.s32 %v443, 8
      %v562 = vadd.s32 %v450, 8
      %v563 = vadd.s32 %v457, 8
      %v564 = vadd.s32 %v464, 8
      %v565 = vadd.s32 %v471, 8
      %v566 = vadd.s32 %v478, 8
      %v567 = vadd.s32 %v485, 8
      %v568 = vadd.s32 %v492, 8
      %v569 = vadd.s32 %v499, 8
      %v570 = vadd.s32 %v506, 8
      %v571 = vsel %vm539, %v555, %v401
      %v572 = vsel %vm540, %v556, %v408
      %v573 = vsel %vm541, %v557, %v415
      %v574 = vsel %vm542, %v558, %v422
      %v575 = vsel %vm543, %v559, %v429
      %v576 = vsel %vm544, %v560, %v436
      %v577 = vsel %vm545, %v561, %v443
      %v578 = vsel %vm546, %v562, %v450
      %v579 = vsel %vm547, %v563, %v457
      %v580 = vsel %vm548, %v564, %v464
      %v581 = vsel %vm549, %v565, %v471
      %v582 = vsel %vm550, %v566, %v478
      %v583 = vsel %vm551, %v567, %v485
      %v584 = vsel %vm552, %v568, %v492
      %v585 = vsel %vm553, %v569, %v499
      %v586 = vsel %vm554, %v570, %v506
      %v587 = vlaneseq
      %v588 = vand.u32 %v587, 127
      %vm589 = vcmp.eq.s32.totalorder %v571, %v588
      %vm590 = vcmp.eq.s32.totalorder %v572, %v588
      %vm591 = vcmp.eq.s32.totalorder %v573, %v588
      %vm592 = vcmp.eq.s32.totalorder %v574, %v588
      %vm593 = vcmp.eq.s32.totalorder %v575, %v588
      %vm594 = vcmp.eq.s32.totalorder %v576, %v588
      %vm595 = vcmp.eq.s32.totalorder %v577, %v588
      %vm596 = vcmp.eq.s32.totalorder %v578, %v588
      %vm597 = vcmp.eq.s32.totalorder %v579, %v588
      %vm598 = vcmp.eq.s32.totalorder %v580, %v588
      %vm599 = vcmp.eq.s32.totalorder %v581, %v588
      %vm600 = vcmp.eq.s32.totalorder %v582, %v588
      %vm601 = vcmp.eq.s32.totalorder %v583, %v588
      %vm602 = vcmp.eq.s32.totalorder %v584, %v588
      %vm603 = vcmp.eq.s32.totalorder %v585, %v588
      %vm604 = vcmp.eq.s32.totalorder %v586, %v588
      %v605 = vsel %vm589, 1, 0
      %v606 = vsel %vm590, 1, 0
      %v607 = vsel %vm591, 1, 0
      %v608 = vsel %vm592, 1, 0
      %v609 = vsel %vm593, 1, 0
      %v610 = vsel %vm594, 1, 0
      %v611 = vsel %vm595, 1, 0
      %v612 = vsel %vm596, 1, 0
      %v613 = vsel %vm597, 1, 0
      %v614 = vsel %vm598, 1, 0
      %v615 = vsel %vm599, 1, 0
      %v616 = vsel %vm600, 1, 0
      %v617 = vsel %vm601, 1, 0
      %v618 = vsel %vm602, 1, 0
      %v619 = vsel %vm603, 1, 0
      %v620 = vsel %vm604, 1, 0
      %v621 = vcvt.s32.f32 %v605
      %v622 = vcvt.s32.f32 %v606
      %v623 = vcvt.s32.f32 %v607
      %v624 = vcvt.s32.f32 %v608
      %v625 = vcvt.s32.f32 %v609
      %v626 = vcvt.s32.f32 %v610
      %v627 = vcvt.s32.f32 %v611
      %v628 = vcvt.s32.f32 %v612
      %v629 = vcvt.s32.f32 %v613
      %v630 = vcvt.s32.f32 %v614
      %v631 = vcvt.s32.f32 %v615
      %v632 = vcvt.s32.f32 %v616
      %v633 = vcvt.s32.f32 %v617
      %v634 = vcvt.s32.f32 %v618
      %v635 = vcvt.s32.f32 %v619
      %v636 = vcvt.s32.f32 %v620
      %vm637 = vcmp.lt.s32.totalorder %v588, 0
      %v638 = vsub.s32 0, %v588
      %v639 = vsel %vm637, %v638, %v588
      %v640 = vshrl.u32 %v639, 3
      %v641 = vand.u32 %v639, 7
      %v642 = vsub.s32 0, %v641
      %v643 = vsel %vm637, %v642, %v641
      %vm644 = vcmp.ne.s32.totalorder %v643, 0
      %vm645 = vcmp.lt.s32.totalorder %v643, 0
      %vm646 = vmand %vm645, %vm644
      %v647 = vadd.s32 %v643, 8
      %v648 = vsel %vm646, %v647, %v643
      %vm649 = vcmp.eq.s32.totalorder %v379, %v648
      %v650 = vsel %vm649, 1, 0
      %v651 = vcvt.s32.f32 %v650
      %v652 = vadd.f32 %v376, %v377
      %v653 = vrot.slane %v652, 4
      %v654 = vadd.f32 %v652, %v653
      %v655 = vrot.slane %v654, 2
      %v656 = vadd.f32 %v654, %v655
      %v657 = vrot.slane %v656, 1
      %v658 = vadd.f32 %v656, %v657
      %v659 = vmul.f32 %v376, %v376
      %v660 = vmul.f32 %v377, %v377
      %v661 = vadd.f32 %v659, %v660
      %v662 = vrot.slane %v661, 4
      %v663 = vadd.f32 %v661, %v662
      %v664 = vrot.slane %v663, 2
      %v665 = vadd.f32 %v663, %v664
      %v666 = vrot.slane %v665, 1
      %v667 = vadd.f32 %v665, %v666
      %668 = vmatpush.msra.mxu0 %v636
      %669 = vmatpush.msra.mxu0 %v635
      %670 = vmatpush.msra.mxu0 %v634
      %671 = vmatpush.msra.mxu0 %v633
      %672 = vmatpush.msra.mxu0 %v632
      %673 = vmatpush.msra.mxu0 %v631
      %674 = vmatpush.msra.mxu0 %v630
      %675 = vmatpush.msra.mxu0 %v629
      %676 = vmatpush.msra.mxu0 %v628
      %677 = vmatpush.msra.mxu0 %v627
      %678 = vmatpush.msra.mxu0 %v626
      %679 = vmatpush.msra.mxu0 %v625
      %680 = vmatpush.msra.mxu0 %v624
      %681 = vmatpush.msra.mxu0 %v623
      %682 = vmatpush.msra.mxu0 %v622
      %683 = vmatpush.msra.mxu0 %v621
      %684 = vmatmul.f32.gmra.mxu0 %v658
      %v685 = vpop.f32.mrf.mxu0
      %v686 = vadd.f32 0.0, %v685
      %687 = vdwg.mxu0
      %v688 = vmul.f32 %v686, 0.00390625
      %689 = vmatpush.msra.mxu0 %v636
      %690 = vmatpush.msra.mxu0 %v635
      %691 = vmatpush.msra.mxu0 %v634
      %692 = vmatpush.msra.mxu0 %v633
      %693 = vmatpush.msra.mxu0 %v632
      %694 = vmatpush.msra.mxu0 %v631
      %695 = vmatpush.msra.mxu0 %v630
      %696 = vmatpush.msra.mxu0 %v629
      %697 = vmatpush.msra.mxu0 %v628
      %698 = vmatpush.msra.mxu0 %v627
      %699 = vmatpush.msra.mxu0 %v626
      %700 = vmatpush.msra.mxu0 %v625
      %701 = vmatpush.msra.mxu0 %v624
      %702 = vmatpush.msra.mxu0 %v623
      %703 = vmatpush.msra.mxu0 %v622
      %704 = vmatpush.msra.mxu0 %v621
      %705 = vmatmul.f32.gmra.mxu0 %v667
      %v706 = vpop.f32.mrf.mxu0
      %v707 = vadd.f32 0.0, %v706
      %708 = vdwg.mxu0
      %v709 = vmul.f32 %v707, 0.00390625
      %v710 = vmul.f32 %v688, %v688
      %v711 = vsub.f32 %v709, %v710
      %v712 = vadd.f32 %v711, 1e-05
      %v713 = vrsqrt.pop %v712
      %v714 = vmul.f32 %v713, %v712
      %v715 = vmul.f32 %v714, %v713
      %v716 = vmul.f32 0.5, %v715
      %v717 = vsub.f32 1.5, %v716
      %v718 = vmul.f32 %v713, %v717
      %vm719 = vweird.f32 %v712
      %vm720 = vweird.f32 %v713
      %vm721 = vmor %vm719, %vm720
      %v722 = vsel %vm721, %v713, %v718
      %vm723 = vcmask 64512
      %v725 = vsel %vm723, %v688, 0
      %727 = vmatpush.msra.mxu0 0.0
      %728 = vmatpush.msra.mxu0 0.0
      %729 = vmatpush.msra.mxu0 0.0
      %730 = vmatpush.msra.mxu0 0.0
      %731 = vmatpush.msra.mxu0 0.0
      %732 = vmatpush.msra.mxu0 0.0
      %733 = vmatpush.msra.mxu0 0.0
      %734 = vmatpush.msra.mxu0 0.0
      %735 = vmatpush.msra.mxu0 0.0
      %736 = vmatpush.msra.mxu0 0.0
      %737 = vmatpush.msra.mxu0 0.0
      %738 = vmatpush.msra.mxu0 0.0
      %739 = vmatpush.msra.mxu0 0.0
      %740 = vmatpush.msra.mxu0 0.0
      %741 = vmatpush.msra.mxu0 0.0
      %742 = vmatpush.msra.mxu0 %v651
      %743 = vmatmul.f32.gmra.mxu0 %v725
      %v744 = vpop.f32.mrf.mxu0
      %v745 = vadd.f32 0.0, %v744
      %746 = vdwg.mxu0
      %v748 = vsel %vm723, %v722, 0
      %750 = vmatpush.msra.mxu0 0.0
      %751 = vmatpush.msra.mxu0 0.0
      %752 = vmatpush.msra.mxu0 0.0
      %753 = vmatpush.msra.mxu0 0.0
      %754 = vmatpush.msra.mxu0 0.0
      %755 = vmatpush.msra.mxu0 0.0
      %756 = vmatpush.msra.mxu0 0.0
      %757 = vmatpush.msra.mxu0 0.0
      %758 = vmatpush.msra.mxu0 0.0
      %759 = vmatpush.msra.mxu0 0.0
      %760 = vmatpush.msra.mxu0 0.0
      %761 = vmatpush.msra.mxu0 0.0
      %762 = vmatpush.msra.mxu0 0.0
      %763 = vmatpush.msra.mxu0 0.0
      %764 = vmatpush.msra.mxu0 0.0
      %765 = vmatpush.msra.mxu0 %v651
      %766 = vmatmul.f32.gmra.mxu0 %v748
      %v767 = vpop.f32.mrf.mxu0
      %v768 = vadd.f32 0.0, %v767
      %769 = vdwg.mxu0
      %v770 = vperm.slane %v745, 0
      %v771 = vsub.f32 %v376, %v770
      %v772 = vsub.f32 %v377, %v770
      %v773 = vperm.slane %v768, 0
      %v774 = vmul.f32 %v771, %v773
      %v775 = vmul.f32 %v772, %v773
      %v776 = vmax.f32 %v774, 0.0
      %v777 = vmax.f32 %v775, 0.0
      %v778 = vlaneseq
      %vm779 = vcmp.ge.s32.totalorder %v778, 0
      %vm780 = vcmp.lt.s32.totalorder %v778, 144
      %vm781 = vmand %vm779, %vm780
      %782 = vst.msk [vmem:[#allocation3] ss:$8 sm:$0x3] %vm781, 0.0
      %783 = vst.msk [vmem:[#allocation3] ss:$8 sm:$0x0] %vm781, 0.0
      %s784 = scalar_lea.vmem [#allocation3], 33
      %785 = vst.msk [vmem:[%s784] ss:$8 sm:$0x3] %vm781, 0.0
      %786 = vst.msk [vmem:[%s784] ss:$8 sm:$0x0] %vm781, 0.0
      %vm787 = vcmask 64513
      %788 = vst.msk [vmem:[#allocation3] sm:$0xfe] %vm787, 0.0
      %789 = vst.msk [vmem:[#allocation3 + $0x10] sm:$0xff] %vm723, 0.0
      %vm790 = vcmask 57344
      %791 = vst.msk [vmem:[#allocation3 + $0x20] sm:$0x1] %vm790, 0.0
      %vm792 = vcmask 130113
      %793 = vst.msk [vmem:[#allocation3 + $0x8] sm:$0xfe] %vm792, 0.0
      %vm794 = vcmask 130112
      %795 = vst.msk [vmem:[#allocation3 + $0x18] sm:$0xff] %vm794, 0.0
      %vm796 = vcmask 122944
      %797 = vst.msk [vmem:[#allocation3 + $0x28] sm:$0x1] %vm796, 0.0
      %vm800 = vcmask 1040384
      %v801 = vrot.slane %v776, 7
      %v802 = vrot.slane %v777, 7
      %v803 = vsel %vm800, %v801, %v802
      %804 = vrot.lane.b32.xlu0 %v801, 8
      %v805 = vpop.permute.xlu0 %804
      %806 = vrot.lane.b32.xlu0 %v803, 8
      %v807 = vpop.permute.xlu0 %806
      %808 = vrot.lane.b32.xlu0 %v802, 8
      %v809 = vpop.permute.xlu0 %808
      %vm813 = vcmask 1047617
      %814 = vst.msk [vmem:[#allocation3] sm:$0xfe] %vm813, %v805
      %815 = vst.msk [vmem:[#allocation3 + $0x8] sm:$0xfe] %vm787, %v805
      %vm816 = vcmask 1047616
      %817 = vst.msk [vmem:[#allocation3 + $0x10] sm:$0xff] %vm816, %v807
      %818 = vst.msk [vmem:[#allocation3 + $0x18] sm:$0xff] %vm723, %v807
      %vm819 = vcmask 1040448
      %820 = vst.msk [vmem:[#allocation3 + $0x20] sm:$0x1] %vm819, %v809
      %821 = vst.msk [vmem:[#allocation3 + $0x28] sm:$0x1] %vm790, %v809
      %v822 = vld [vmem:[#allocation3] sm:$0xff]
      %v823 = vld [vmem:[#allocation3 + $0x8] sm:$0xff]
      %v824 = vld [vmem:[#allocation3 + $0x10] sm:$0xff]
      %v825 = vld [vmem:[#allocation3 + $0x18] sm:$0xff]
      %v826 = vld [vmem:[%s3] sm:$0xff]
      %v827 = vld [vmem:[%s3 + $0x8] sm:$0xff]
      %v828 = vld [vmem:[%s3 + $0x10] sm:$0xff]
      %v829 = vld [vmem:[%s3 + $0x18] sm:$0xff]
      %v830 = vld [vmem:[%s3 + $0x20] sm:$0xff]
      %v831 = vld [vmem:[%s3 + $0x28] sm:$0xff]
      %v832 = vld [vmem:[%s3 + $0x30] sm:$0xff]
      %v833 = vld [vmem:[%s3 + $0x38] sm:$0xff]
      %v834 = vld [vmem:[%s3 + $0x40] sm:$0xff]
      %v835 = vld [vmem:[%s3 + $0x48] sm:$0xff]
      %v836 = vld [vmem:[%s3 + $0x50] sm:$0xff]
      %v837 = vld [vmem:[%s3 + $0x58] sm:$0xff]
      %v838 = vld [vmem:[%s3 + $0x60] sm:$0xff]
      %v839 = vld [vmem:[%s3 + $0x68] sm:$0xff]
      %v840 = vld [vmem:[%s3 + $0x70] sm:$0xff]
      %v841 = vld [vmem:[%s3 + $0x78] sm:$0xff]
      %v842 = vld [vmem:[%s3 + $0x80] sm:$0xff]
      %v843 = vld [vmem:[%s3 + $0x88] sm:$0xff]
      %v844 = vld [vmem:[#allocation3] sm:$0xfe]
      %v845 = vld [vmem:[#allocation3 + $0x8] sm:$0xfe]
      %v846 = vld [vmem:[#allocation3 + $0x20] sm:$0x1]
      %v847 = vld [vmem:[#allocation3 + $0x28] sm:$0x1]
      %s848 = scalar_lea.vmem %s3, 144
      %v849 = vld [vmem:[%s848] sm:$0xff]
      %v850 = vld [vmem:[%s848 + $0x8] sm:$0xff]
      %v851 = vld [vmem:[%s848 + $0x10] sm:$0xff]
      %v852 = vld [vmem:[%s848 + $0x18] sm:$0xff]
      %v853 = vld [vmem:[%s848 + $0x20] sm:$0xff]
      %v854 = vld [vmem:[%s848 + $0x28] sm:$0xff]
      %v855 = vld [vmem:[%s848 + $0x30] sm:$0xff]
      %v856 = vld [vmem:[%s848 + $0x38] sm:$0xff]
      %v857 = vld [vmem:[%s848 + $0x40] sm:$0xff]
      %v858 = vld [vmem:[%s848 + $0x48] sm:$0xff]
      %v859 = vld [vmem:[%s848 + $0x50] sm:$0xff]
      %v860 = vld [vmem:[%s848 + $0x58] sm:$0xff]
      %v861 = vld [vmem:[%s848 + $0x60] sm:$0xff]
      %v862 = vld [vmem:[%s848 + $0x68] sm:$0xff]
      %v863 = vld [vmem:[%s848 + $0x70] sm:$0xff]
      %v864 = vld [vmem:[%s848 + $0x78] sm:$0xff]
      %v865 = vld [vmem:[%s848 + $0x80] sm:$0xff]
      %v866 = vld [vmem:[%s848 + $0x88] sm:$0xff]
      %vm873 = vcmask 1046528
      %v874 = vrot.slane %v844, 1
      %v875 = vrot.slane %v824, 1
      %v876 = vsel %vm873, %v874, %v875
      %v877 = vrot.slane %v845, 1
      %v878 = vrot.slane %v825, 1
      %v879 = vsel %vm873, %v877, %v878
      %v880 = vrot.slane %v846, 1
      %v881 = vsel %vm873, %v875, %v880
      %v882 = vrot.slane %v847, 1
      %v883 = vsel %vm873, %v878, %v882
      %vm886 = vcmask 130048
      %v887 = vsel %vm886, %v879, 0
      %v889 = vsel %vm886, %v883, 0
      %891 = vmatpush.msra.mxu0 %v864
      %892 = vmatpush.msra.mxu0 %v863
      %893 = vmatpush.msra.mxu0 %v862
      %894 = vmatpush.msra.mxu0 %v861
      %895 = vmatpush.msra.mxu0 %v860
      %896 = vmatpush.msra.mxu0 %v859
      %897 = vmatpush.msra.mxu0 %v858
      %898 = vmatpush.msra.mxu0 %v857
      %899 = vmatpush.msra.mxu0 %v856
      %900 = vmatpush.msra.mxu0 %v855
      %901 = vmatpush.msra.mxu0 %v854
      %902 = vmatpush.msra.mxu0 %v853
      %903 = vmatpush.msra.mxu0 %v852
      %904 = vmatpush.msra.mxu0 %v851
      %905 = vmatpush.msra.mxu0 %v850
      %906 = vmatpush.msra.mxu0 %v849
      %907 = vmatmul.f32.gmra.mxu0 %v876
      %v908 = vpop.f32.mrf.mxu0
      %v909 = vadd.f32 0.0, %v908
      %910 = vmatmul.f32.gmra.mxu0 %v881
      %v911 = vpop.f32.mrf.mxu0
      %v912 = vadd.f32 0.0, %v911
      %913 = vdwg.mxu0
      %914 = vmatpush.msra.mxu0 0.0
      %915 = vmatpush.msra.mxu0 0.0
      %916 = vmatpush.msra.mxu0 0.0
      %917 = vmatpush.msra.mxu0 0.0
      %918 = vmatpush.msra.mxu0 0.0
      %919 = vmatpush.msra.mxu0 0.0
      %920 = vmatpush.msra.mxu0 0.0
      %921 = vmatpush.msra.mxu0 0.0
      %922 = vmatpush.msra.mxu0 0.0
      %923 = vmatpush.msra.mxu0 0.0
      %924 = vmatpush.msra.mxu0 0.0
      %925 = vmatpush.msra.mxu0 0.0
      %926 = vmatpush.msra.mxu0 0.0
      %927 = vmatpush.msra.mxu0 0.0
      %928 = vmatpush.msra.mxu0 %v866
      %929 = vmatpush.msra.mxu0 %v865
      %930 = vmatmul.f32.gmra.mxu0 %v887
      %v931 = vpop.f32.mrf.mxu0
      %v932 = vadd.f32 %v909, %v931
      %933 = vmatmul.f32.gmra.mxu0 %v889
      %v934 = vpop.f32.mrf.mxu0
      %v935 = vadd.f32 %v912, %v934
      %936 = vdwg.mxu0
      %v938 = vsel %vm886, %v823, 0
      %v940 = vsel %vm886, %v825, 0
      %942 = vmatpush.msra.mxu0 %v841
      %943 = vmatpush.msra.mxu0 %v840
      %944 = vmatpush.msra.mxu0 %v839
      %945 = vmatpush.msra.mxu0 %v838
      %946 = vmatpush.msra.mxu0 %v837
      %947 = vmatpush.msra.mxu0 %v836
      %948 = vmatpush.msra.mxu0 %v835
      %949 = vmatpush.msra.mxu0 %v834
      %950 = vmatpush.msra.mxu0 %v833
      %951 = vmatpush.msra.mxu0 %v832
      %952 = vmatpush.msra.mxu0 %v831
      %953 = vmatpush.msra.mxu0 %v830
      %954 = vmatpush.msra.mxu0 %v829
      %955 = vmatpush.msra.mxu0 %v828
      %956 = vmatpush.msra.mxu0 %v827
      %957 = vmatpush.msra.mxu0 %v826
      %958 = vmatmul.f32.gmra.mxu0 %v822
      %v959 = vpop.f32.mrf.mxu0
      %v960 = vadd.f32 %v932, %v959
      %961 = vmatmul.f32.gmra.mxu0 %v824
      %v962 = vpop.f32.mrf.mxu0
      %v963 = vadd.f32 %v935, %v962
      %964 = vdwg.mxu0
      %965 = vmatpush.msra.mxu0 0.0
      %966 = vmatpush.msra.mxu0 0.0
      %967 = vmatpush.msra.mxu0 0.0
      %968 = vmatpush.msra.mxu0 0.0
      %969 = vmatpush.msra.mxu0 0.0
      %970 = vmatpush.msra.mxu0 0.0
      %971 = vmatpush.msra.mxu0 0.0
      %972 = vmatpush.msra.mxu0 0.0
      %973 = vmatpush.msra.mxu0 0.0
      %974 = vmatpush.msra.mxu0 0.0
      %975 = vmatpush.msra.mxu0 0.0
      %976 = vmatpush.msra.mxu0 0.0
      %977 = vmatpush.msra.mxu0 0.0
      %978 = vmatpush.msra.mxu0 0.0
      %979 = vmatpush.msra.mxu0 %v843
      %980 = vmatpush.msra.mxu0 %v842
      %981 = vmatmul.f32.gmra.mxu0 %v938
      %v982 = vpop.f32.mrf.mxu0
      %v983 = vadd.f32 %v960, %v982
      %984 = vmatmul.f32.gmra.mxu0 %v940
      %v985 = vpop.f32.mrf.mxu0
      %v986 = vadd.f32 %v963, %v985
      %987 = vdwg.mxu0
      %v988 = vld [vmem:[#allocation3] sm:$0xfc]
      %v989 = vld [vmem:[#allocation3 + $0x8] sm:$0xfc]
      %v990 = vld [vmem:[#allocation3 + $0x20] sm:$0x3]
      %v991 = vld [vmem:[#allocation3 + $0x28] sm:$0x3]
      %s992 = scalar_lea.vmem %s3, 288
      %v993 = vld [vmem:[%s992] sm:$0xff]
      %v994 = vld [vmem:[%s992 + $0x8] sm:$0xff]
      %v995 = vld [vmem:[%s992 + $0x10] sm:$0xff]
      %v996 = vld [vmem:[%s992 + $0x18] sm:$0xff]
      %v997 = vld [vmem:[%s992 + $0x20] sm:$0xff]
      %v998 = vld [vmem:[%s992 + $0x28] sm:$0xff]
      %v999 = vld [vmem:[%s992 + $0x30] sm:$0xff]
      %v1000 = vld [vmem:[%s992 + $0x38] sm:$0xff]
      %v1001 = vld [vmem:[%s992 + $0x40] sm:$0xff]
      %v1002 = vld [vmem:[%s992 + $0x48] sm:$0xff]
      %v1003 = vld [vmem:[%s992 + $0x50] sm:$0xff]
      %v1004 = vld [vmem:[%s992 + $0x58] sm:$0xff]
      %v1005 = vld [vmem:[%s992 + $0x60] sm:$0xff]
      %v1006 = vld [vmem:[%s992 + $0x68] sm:$0xff]
      %v1007 = vld [vmem:[%s992 + $0x70] sm:$0xff]
      %v1008 = vld [vmem:[%s992 + $0x78] sm:$0xff]
      %v1009 = vld [vmem:[%s992 + $0x80] sm:$0xff]
      %v1010 = vld [vmem:[%s992 + $0x88] sm:$0xff]
      %vm1015 = vcmask 1045504
      %v1016 = vrot.slane %v988, 2
      %v1017 = vrot.slane %v824, 2
      %v1018 = vsel %vm1015, %v1016, %v1017
      %v1019 = vrot.slane %v989, 2
      %v1020 = vrot.slane %v825, 2
      %v1021 = vsel %vm1015, %v1019, %v1020
      %v1022 = vrot.slane %v990, 2
      %v1023 = vsel %vm1015, %v1017, %v1022
      %v1024 = vrot.slane %v991, 2
      %v1025 = vsel %vm1015, %v1020, %v1024
      %v1028 = vsel %vm886, %v1021, 0
      %v1030 = vsel %vm886, %v1025, 0
      %1032 = vmatpush.msra.mxu0 %v1008
      %1033 = vmatpush.msra.mxu0 %v1007
      %1034 = vmatpush.msra.mxu0 %v1006
      %1035 = vmatpush.msra.mxu0 %v1005
      %1036 = vmatpush.msra.mxu0 %v1004
      %1037 = vmatpush.msra.mxu0 %v1003
      %1038 = vmatpush.msra.mxu0 %v1002
      %1039 = vmatpush.msra.mxu0 %v1001
      %1040 = vmatpush.msra.mxu0 %v1000
      %1041 = vmatpush.msra.mxu0 %v999
      %1042 = vmatpush.msra.mxu0 %v998
      %1043 = vmatpush.msra.mxu0 %v997
      %1044 = vmatpush.msra.mxu0 %v996
      %1045 = vmatpush.msra.mxu0 %v995
      %1046 = vmatpush.msra.mxu0 %v994
      %1047 = vmatpush.msra.mxu0 %v993
      %1048 = vmatmul.f32.gmra.mxu0 %v1018
      %v1049 = vpop.f32.mrf.mxu0
      %v1050 = vadd.f32 0.0, %v1049
      %1051 = vmatmul.f32.gmra.mxu0 %v1023
      %v1052 = vpop.f32.mrf.mxu0
      %v1053 = vadd.f32 0.0, %v1052
      %1054 = vdwg.mxu0
      %1055 = vmatpush.msra.mxu0 0.0
      %1056 = vmatpush.msra.mxu0 0.0
      %1057 = vmatpush.msra.mxu0 0.0
      %1058 = vmatpush.msra.mxu0 0.0
      %1059 = vmatpush.msra.mxu0 0.0
      %1060 = vmatpush.msra.mxu0 0.0
      %1061 = vmatpush.msra.mxu0 0.0
      %1062 = vmatpush.msra.mxu0 0.0
      %1063 = vmatpush.msra.mxu0 0.0
      %1064 = vmatpush.msra.mxu0 0.0
      %1065 = vmatpush.msra.mxu0 0.0
      %1066 = vmatpush.msra.mxu0 0.0
      %1067 = vmatpush.msra.mxu0 0.0
      %1068 = vmatpush.msra.mxu0 0.0
      %1069 = vmatpush.msra.mxu0 %v1010
      %1070 = vmatpush.msra.mxu0 %v1009
      %1071 = vmatmul.f32.gmra.mxu0 %v1028
      %v1072 = vpop.f32.mrf.mxu0
      %v1073 = vadd.f32 %v1050, %v1072
      %1074 = vmatmul.f32.gmra.mxu0 %v1030
      %v1075 = vpop.f32.mrf.mxu0
      %v1076 = vadd.f32 %v1053, %v1075
      %1077 = vdwg.mxu0
      %v1078 = vadd.f32 %v983, %v1073
      %v1079 = vadd.f32 %v986, %v1076
      %v1080 = vld [vmem:[%s4] sm:$0x1]
      %v1082 = vperm.slane %v1080, 0
      %v1084 = vadd.f32 %v1078, %v1082
      %v1085 = vadd.f32 %v1079, %v1082
      %v1086 = vadd.f32 %v1084, %v1085
      %v1087 = vrot.slane %v1086, 4
      %v1088 = vadd.f32 %v1086, %v1087
      %v1089 = vrot.slane %v1088, 2
      %v1090 = vadd.f32 %v1088, %v1089
      %v1091 = vrot.slane %v1090, 1
      %v1092 = vadd.f32 %v1090, %v1091
      %v1093 = vmul.f32 %v1084, %v1084
      %v1094 = vmul.f32 %v1085, %v1085
      %v1095 = vadd.f32 %v1093, %v1094
      %v1096 = vrot.slane %v1095, 4
      %v1097 = vadd.f32 %v1095, %v1096
      %v1098 = vrot.slane %v1097, 2
      %v1099 = vadd.f32 %v1097, %v1098
      %v1100 = vrot.slane %v1099, 1
      %v1101 = vadd.f32 %v1099, %v1100
      %1102 = vmatpush.msra.mxu0 %v636
      %1103 = vmatpush.msra.mxu0 %v635
      %1104 = vmatpush.msra.mxu0 %v634
      %1105 = vmatpush.msra.mxu0 %v633
      %1106 = vmatpush.msra.mxu0 %v632
      %1107 = vmatpush.msra.mxu0 %v631
      %1108 = vmatpush.msra.mxu0 %v630
      %1109 = vmatpush.msra.mxu0 %v629
      %1110 = vmatpush.msra.mxu0 %v628
      %1111 = vmatpush.msra.mxu0 %v627
      %1112 = vmatpush.msra.mxu0 %v626
      %1113 = vmatpush.msra.mxu0 %v625
      %1114 = vmatpush.msra.mxu0 %v624
      %1115 = vmatpush.msra.mxu0 %v623
      %1116 = vmatpush.msra.mxu0 %v622
      %1117 = vmatpush.msra.mxu0 %v621
      %1118 = vmatmul.f32.gmra.mxu0 %v1092
      %v1119 = vpop.f32.mrf.mxu0
      %v1120 = vadd.f32 0.0, %v1119
      %1121 = vdwg.mxu0
      %v1122 = vmul.f32 %v1120, 0.00390625
      %1123 = vmatpush.msra.mxu0 %v636
      %1124 = vmatpush.msra.mxu0 %v635
      %1125 = vmatpush.msra.mxu0 %v634
      %1126 = vmatpush.msra.mxu0 %v633
      %1127 = vmatpush.msra.mxu0 %v632
      %1128 = vmatpush.msra.mxu0 %v631
      %1129 = vmatpush.msra.mxu0 %v630
      %1130 = vmatpush.msra.mxu0 %v629
      %1131 = vmatpush.msra.mxu0 %v628
      %1132 = vmatpush.msra.mxu0 %v627
      %1133 = vmatpush.msra.mxu0 %v626
      %1134 = vmatpush.msra.mxu0 %v625
      %1135 = vmatpush.msra.mxu0 %v624
      %1136 = vmatpush.msra.mxu0 %v623
      %1137 = vmatpush.msra.mxu0 %v622
      %1138 = vmatpush.msra.mxu0 %v621
      %1139 = vmatmul.f32.gmra.mxu0 %v1101
      %v1140 = vpop.f32.mrf.mxu0
      %v1141 = vadd.f32 0.0, %v1140
      %1142 = vdwg.mxu0
      %v1143 = vmul.f32 %v1141, 0.00390625
      %v1144 = vmul.f32 %v1122, %v1122
      %v1145 = vsub.f32 %v1143, %v1144
      %v1146 = vadd.f32 %v1145, 1e-05
      %v1147 = vrsqrt.pop %v1146
      %v1148 = vmul.f32 %v1147, %v1146
      %v1149 = vmul.f32 %v1148, %v1147
      %v1150 = vmul.f32 0.5, %v1149
      %v1151 = vsub.f32 1.5, %v1150
      %v1152 = vmul.f32 %v1147, %v1151
      %vm1153 = vweird.f32 %v1146
      %vm1154 = vweird.f32 %v1147
      %vm1155 = vmor %vm1153, %vm1154
      %v1156 = vsel %vm1155, %v1147, %v1152
      %v1158 = vsel %vm723, %v1122, 0
      %1160 = vmatpush.msra.mxu0 0.0
      %1161 = vmatpush.msra.mxu0 0.0
      %1162 = vmatpush.msra.mxu0 0.0
      %1163 = vmatpush.msra.mxu0 0.0
      %1164 = vmatpush.msra.mxu0 0.0
      %1165 = vmatpush.msra.mxu0 0.0
      %1166 = vmatpush.msra.mxu0 0.0
      %1167 = vmatpush.msra.mxu0 0.0
      %1168 = vmatpush.msra.mxu0 0.0
      %1169 = vmatpush.msra.mxu0 0.0
      %1170 = vmatpush.msra.mxu0 0.0
      %1171 = vmatpush.msra.mxu0 0.0
      %1172 = vmatpush.msra.mxu0 0.0
      %1173 = vmatpush.msra.mxu0 0.0
      %1174 = vmatpush.msra.mxu0 0.0
      %1175 = vmatpush.msra.mxu0 %v651
      %1176 = vmatmul.f32.gmra.mxu0 %v1158
      %v1177 = vpop.f32.mrf.mxu0
      %v1178 = vadd.f32 0.0, %v1177
      %1179 = vdwg.mxu0
      %v1181 = vsel %vm723, %v1156, 0
      %1183 = vmatpush.msra.mxu0 0.0
      %1184 = vmatpush.msra.mxu0 0.0
      %1185 = vmatpush.msra.mxu0 0.0
      %1186 = vmatpush.msra.mxu0 0.0
      %1187 = vmatpush.msra.mxu0 0.0
      %1188 = vmatpush.msra.mxu0 0.0
      %1189 = vmatpush.msra.mxu0 0.0
      %1190 = vmatpush.msra.mxu0 0.0
      %1191 = vmatpush.msra.mxu0 0.0
      %1192 = vmatpush.msra.mxu0 0.0
      %1193 = vmatpush.msra.mxu0 0.0
      %1194 = vmatpush.msra.mxu0 0.0
      %1195 = vmatpush.msra.mxu0 0.0
      %1196 = vmatpush.msra.mxu0 0.0
      %1197 = vmatpush.msra.mxu0 0.0
      %1198 = vmatpush.msra.mxu0 %v651
      %1199 = vmatmul.f32.gmra.mxu0 %v1181
      %v1200 = vpop.f32.mrf.mxu0
      %v1201 = vadd.f32 0.0, %v1200
      %1202 = vdwg.mxu0
      %v1203 = vperm.slane %v1178, 0
      %v1204 = vsub.f32 %v1084, %v1203
      %v1205 = vsub.f32 %v1085, %v1203
      %v1206 = vperm.slane %v1201, 0
      %v1207 = vmul.f32 %v1204, %v1206
      %v1208 = vmul.f32 %v1205, %v1206
      %v1209 = vmax.f32 %v1207, 0.0
      %v1210 = vmax.f32 %v1208, 0.0
      %1211 = vst [vmem:[%s224] sm:$0xff] %v1209
      %1212 = vst [vmem:[%s224 + $0x8] sm:$0xff] %v1210
      %p1213 = scmp.lt.s32.totalorder %s16, 1
      %s1214 = scalar_select %p1213, %s16, 1
      %s1215 = smul.addr %s1214, 2
      %s1216 = smul.addr %s1215, 8
      %s1217 = scalar_lea.vmem %s5, %s1216
      // Predicated region
      $region41: #{double_conv.1} parent=39 // pred_check
        %p1218 = pneg %p144
      $region42: #{double_conv.1} parent=39 // pred_check_branch
        %1220 = sbr.rel (%p1218) target = $region44
      $region43: #{double_conv.1} parent=39 // pred_region
        _
      $region44: #{double_conv.1} parent=39 // pred_fallthru
        _
    $region40: #{double_conv.1} parent=5 // pred_fallthru
      _
    %p1221 = scmp.le.s32.totalorder 2, %s11
    // Predicated region
    $region45: #{double_conv.1} parent=5 // pred_check
      %p1222 = pneg %p1221
    $region46: #{double_conv.1} parent=5 // pred_check_branch
      %1224 = sbr.rel (%p1222) target = $region48
    $region47: #{double_conv.1} parent=5 // pred_region
      %s1225 = ssub.s32 %s11, 2
      // Predicated region
      $region49: #{double_conv.1} parent=47 // pred_check
        %p1226 = pneg %p150
      $region50: #{double_conv.1} parent=47 // pred_check_branch
        %1228 = sbr.rel (%p1226) target = $region52
      $region51: #{double_conv.1} parent=47 // pred_region
        %p1229 = scmp.lt.s32.totalorder %s17, 1
        %s1230 = scalar_select %p1229, %s17, 1
        %s1231 = smul.addr %s1230, 2
        %s1232 = smul.addr %s1231, 8
        %s1233 = scalar_lea.vmem %s5, %s1232
      $region52: #{double_conv.1} parent=47 // pred_fallthru
        _
    $region48: #{double_conv.1} parent=5 // pred_fallthru
      _
  $region6: #{double_conv.1} parent=0 // loop_footer
    %s15 = sadd.s32 1, %s11
  $region7: #{double_conv.1} parent=0 // loop_footer_branch
    %10 = sbr.rel target = $region3
  $region8: #{double_conv.1} parent=0 // loop_exit
    _

</llo_original>
